<compile_context>
chip_gen: v7x
topology: tpu7x:2x2x1
jax: 0.10.0
libtpu: 0.0.40
codegen_flags: <defaults>
</compile_context>

<pallas_src>
import jax
import jax.numpy as jnp
from jax.experimental import pallas as pl
from jax.experimental.pallas import tpu as pltpu


def _rnn_lm_kernel(ids_ref, h0_ref, xw_ref, whh_ref, wout_ref, bout_ref,
                   logits_ref, hid_ref):
    """Fused TextGenerator forward.

    ids_ref   : (B, T)    int32 SMEM  token ids
    h0_ref    : (1, B, H) f32   VMEM  initial hidden state
    xw_ref    : (V, H)    f32   VMEM  embed_w @ W_ih^T + b_ih + b_hh  (pre-folded)
    whh_ref   : (H, H)    bf16  VMEM  W_hh^T
    wout_ref  : (H, V)    bf16  VMEM  W_out^T
    bout_ref  : (1, V)    f32   VMEM  b_out
    logits_ref: (B*T, V)  f32   VMEM  batch-major rows (row = b*T + t)
    hid_ref   : (1, B, H) f32   VMEM  final hidden state
    """
    B, T = ids_ref.shape
    H = whh_ref.shape[0]
    Bp = ((B + 7) // 8) * 8          # sublane-aligned working batch
    npad = Bp - B
    zpad = jnp.zeros((npad, H), jnp.float32) if npad else None

    # ---- In-kernel embedding gather of the pre-projected inputs -----------------
    # x_t[b] = (embed_w @ W_ih^T + b_ih + b_hh)[ids[b, t]].  Gathers are issued up
    # front, off the serial critical path.  Padded batch rows are zeros.
    x_ts = []
    for t in range(T):
        rows = [xw_ref[pl.ds(ids_ref[b, t], 1), :] for b in range(B)]
        if npad:
            rows.append(zpad)
        x_ts.append(jnp.concatenate(rows, axis=0))            # (Bp, H) f32

    # ---- Initial hidden state, padded to Bp sublanes ----------------------------
    h = h0_ref[0, :, :]                                        # (B, H) f32
    if npad:
        h = jnp.concatenate([h, zpad], axis=0)                 # (Bp, H) f32

    # ---- Serial tanh recurrence, fully unrolled (T static & small) --------------
    whh = whh_ref[...]                                         # one 256x256 bf16 tile, loaded once
    hs = []
    for t in range(T):
        h = jnp.tanh(
            x_ts[t] + jnp.dot(h.astype(whh.dtype), whh,
                              preferred_element_type=jnp.float32))
        hs.append(h)                                           # (Bp, H) f32, kept in vregs
    hid_ref[0, :, :] = h[:B, :]

    # ---- One batched output projection, rows already batch-major (b*T + t) ------
    h_rows = [hs[t][b:b + 1, :] for b in range(B) for t in range(T)]
    h_bm = jnp.concatenate(h_rows, axis=0)                     # (B*T, H) f32
    logits_ref[...] = (
        jnp.dot(h_bm.astype(wout_ref.dtype), wout_ref[...],
                preferred_element_type=jnp.float32) + bout_ref[...]
    ).astype(logits_ref.dtype)


def prepare_params(params):
    """One-time (outside jit) preparation: fold the input projection into the embedding
    table in f32 and pre-transpose/cast the remaining matmul operands to bf16."""
    xw = (params["embed_w"].astype(jnp.float32)
          @ params["w_ih"].T.astype(jnp.float32)
          + params["b_ih"].astype(jnp.float32)
          + params["b_hh"].astype(jnp.float32))                # (V, H) f32
    return {
        "xw":     xw,
        "whh_t":  params["w_hh"].T.astype(jnp.bfloat16),       # (H, H)
        "wout_t": params["w_out"].T.astype(jnp.bfloat16),      # (H, V)
        "bout":   params["b_out"].reshape(1, -1).astype(jnp.float32),
    }


def text_generator_forward(inputs, hidden, kparams):
    """Pallas implementation of TextGenerator.forward.

    inputs: (B, T) int32 token ids, hidden: (1, B, H) f32.
    Returns (logits, hid): logits (B*T, V) f32 in batch-major row order (matching
    out.reshape(-1, H) @ W_out^T + b_out), hid (1, B, H) f32.
    """
    B, T = inputs.shape
    H = kparams["whh_t"].shape[0]
    V = kparams["wout_t"].shape[1]

    smem = pl.BlockSpec(memory_space=pltpu.MemorySpace.SMEM)
    vmem = pl.BlockSpec(memory_space=pltpu.MemorySpace.VMEM)

    logits, hid = pl.pallas_call(
        _rnn_lm_kernel,
        out_shape=(
            jax.ShapeDtypeStruct((B * T, V), jnp.float32),
            jax.ShapeDtypeStruct((1, B, H), jnp.float32),
        ),
        in_specs=[smem, vmem, vmem, vmem, vmem, vmem],
        out_specs=(vmem, vmem),
    )(inputs.astype(jnp.int32), hidden.astype(jnp.float32),
      kparams["xw"], kparams["whh_t"], kparams["wout_t"], kparams["bout"])

    return logits, hid


def _reference_forward(inputs, hidden, params):
    """Pure-JAX f32 reference mirroring the PyTorch module semantics."""
    embeds = jnp.take(params["embed_w"], inputs, axis=0)       # (B, T, E)
    B, T, _ = embeds.shape
    H = params["w_hh"].shape[0]
    h = hidden[0]
    outs = []
    for t in range(T):
        h = jnp.tanh(embeds[:, t, :] @ params["w_ih"].T + params["b_ih"]
                     + h @ params["w_hh"].T + params["b_hh"])
        outs.append(h)
    out_seq = jnp.stack(outs, axis=1)                          # (B, T, H)
    logits = out_seq.reshape(-1, H) @ params["w_out"].T + params["b_out"]
    return logits, h[None]


if __name__ == "__main__":
    # Small shapes consistent with the module: defaults E=128, H=256; small vocab/batch/seq.
    WORD_COUNT = 128   # vocab size V
    EMBED_DIM = 128
    HIDDEN = 256
    B, T = 2, 8

    key = jax.random.PRNGKey(0)
    ks = jax.random.split(key, 8)
    params = {
        "embed_w": jax.random.normal(ks[0], (WORD_COUNT, EMBED_DIM), jnp.float32) * 0.1,
        "w_ih":    jax.random.normal(ks[1], (HIDDEN, EMBED_DIM), jnp.float32) * 0.05,
        "w_hh":    jax.random.normal(ks[2], (HIDDEN, HIDDEN), jnp.float32) * 0.05,
        "b_ih":    jax.random.normal(ks[3], (HIDDEN,), jnp.float32) * 0.05,
        "b_hh":    jax.random.normal(ks[4], (HIDDEN,), jnp.float32) * 0.05,
        "w_out":   jax.random.normal(ks[5], (WORD_COUNT, HIDDEN), jnp.float32) * 0.05,
        "b_out":   jax.random.normal(ks[6], (WORD_COUNT,), jnp.float32) * 0.05,
    }

    inputs = jax.random.randint(ks[7], (B, T), 0, WORD_COUNT, dtype=jnp.int32)
    hidden0 = jnp.zeros((1, B, HIDDEN), jnp.float32)           # init_hidden(bs)

    kparams = prepare_params(params)                           # one-time prep, outside jit
    fwd = jax.jit(text_generator_forward)
    logits, hid = jax.block_until_ready(fwd(inputs, hidden0, kparams))

    ref_logits, ref_hid = _reference_forward(inputs, hidden0, params)
    assert logits.shape == (B * T, WORD_COUNT) and hid.shape == (1, B, HIDDEN)
    max_err_logits = float(jnp.max(jnp.abs(logits - ref_logits)))
    max_err_hid = float(jnp.max(jnp.abs(hid - ref_hid)))
    assert jnp.allclose(logits, ref_logits, rtol=2e-2, atol=2e-2), max_err_logits
    assert jnp.allclose(hid, ref_hid, rtol=2e-2, atol=2e-2), max_err_hid

    print("KERNEL_OK")
</pallas_src>

<mosaic_0001>
module attributes {stable_mosaic.version = 11 : i64} {
  func.func @_rnn_lm_kernel(%arg0: memref<2x8xi32, #tpu.memory_space<smem>>, %arg1: memref<1x2x256xf32, #tpu.memory_space<vmem>>, %arg2: memref<128x256xf32, #tpu.memory_space<vmem>>, %arg3: memref<256x256xbf16, #tpu.memory_space<vmem>>, %arg4: memref<256x128xbf16, #tpu.memory_space<vmem>>, %arg5: memref<1x128xf32, #tpu.memory_space<vmem>>, %arg6: memref<16x128xf32, #tpu.memory_space<vmem>>, %arg7: memref<1x2x256xf32, #tpu.memory_space<vmem>>) attributes {dimension_semantics = [], scalar_prefetch = 0 : i64, scratch_operands = 0 : i64, tpu.core_type = #tpu.core_type<tc>} {
    %cst = arith.constant 0.000000e+00 : f32
    %0 = vector.broadcast %cst : f32 to vector<6x256xf32>
    %c0 = arith.constant 0 : index
    %c0_0 = arith.constant 0 : index
    %1 = memref.load %arg0[%c0, %c0_0] : memref<2x8xi32, #tpu.memory_space<smem>>
    %2 = arith.index_cast %1 : i32 to index
    %c0_1 = arith.constant 0 : index
    %3 = vector.load %arg2[%2, %c0_1] : memref<128x256xf32, #tpu.memory_space<vmem>>, vector<1x256xf32>
    %c1 = arith.constant 1 : index
    %c0_2 = arith.constant 0 : index
    %4 = memref.load %arg0[%c1, %c0_2] : memref<2x8xi32, #tpu.memory_space<smem>>
    %5 = arith.index_cast %4 : i32 to index
    %c0_3 = arith.constant 0 : index
    %6 = vector.load %arg2[%5, %c0_3] : memref<128x256xf32, #tpu.memory_space<vmem>>, vector<1x256xf32>
    %7 = tpu.concatenate %3, %6, %0 in 0 : vector<1x256xf32>, vector<1x256xf32>, vector<6x256xf32> -> vector<8x256xf32>
    %c0_4 = arith.constant 0 : index
    %c1_5 = arith.constant 1 : index
    %8 = memref.load %arg0[%c0_4, %c1_5] : memref<2x8xi32, #tpu.memory_space<smem>>
    %9 = arith.index_cast %8 : i32 to index
    %c0_6 = arith.constant 0 : index
    %10 = vector.load %arg2[%9, %c0_6] : memref<128x256xf32, #tpu.memory_space<vmem>>, vector<1x256xf32>
    %c1_7 = arith.constant 1 : index
    %c1_8 = arith.constant 1 : index
    %11 = memref.load %arg0[%c1_7, %c1_8] : memref<2x8xi32, #tpu.memory_space<smem>>
    %12 = arith.index_cast %11 : i32 to index
    %c0_9 = arith.constant 0 : index
    %13 = vector.load %arg2[%12, %c0_9] : memref<128x256xf32, #tpu.memory_space<vmem>>, vector<1x256xf32>
    %14 = tpu.concatenate %10, %13, %0 in 0 : vector<1x256xf32>, vector<1x256xf32>, vector<6x256xf32> -> vector<8x256xf32>
    %c0_10 = arith.constant 0 : index
    %c2 = arith.constant 2 : index
    %15 = memref.load %arg0[%c0_10, %c2] : memref<2x8xi32, #tpu.memory_space<smem>>
    %16 = arith.index_cast %15 : i32 to index
    %c0_11 = arith.constant 0 : index
    %17 = vector.load %arg2[%16, %c0_11] : memref<128x256xf32, #tpu.memory_space<vmem>>, vector<1x256xf32>
    %c1_12 = arith.constant 1 : index
    %c2_13 = arith.constant 2 : index
    %18 = memref.load %arg0[%c1_12, %c2_13] : memref<2x8xi32, #tpu.memory_space<smem>>
    %19 = arith.index_cast %18 : i32 to index
    %c0_14 = arith.constant 0 : index
    %20 = vector.load %arg2[%19, %c0_14] : memref<128x256xf32, #tpu.memory_space<vmem>>, vector<1x256xf32>
    %21 = tpu.concatenate %17, %20, %0 in 0 : vector<1x256xf32>, vector<1x256xf32>, vector<6x256xf32> -> vector<8x256xf32>
    %c0_15 = arith.constant 0 : index
    %c3 = arith.constant 3 : index
    %22 = memref.load %arg0[%c0_15, %c3] : memref<2x8xi32, #tpu.memory_space<smem>>
    %23 = arith.index_cast %22 : i32 to index
    %c0_16 = arith.constant 0 : index
    %24 = vector.load %arg2[%23, %c0_16] : memref<128x256xf32, #tpu.memory_space<vmem>>, vector<1x256xf32>
    %c1_17 = arith.constant 1 : index
    %c3_18 = arith.constant 3 : index
    %25 = memref.load %arg0[%c1_17, %c3_18] : memref<2x8xi32, #tpu.memory_space<smem>>
    %26 = arith.index_cast %25 : i32 to index
    %c0_19 = arith.constant 0 : index
    %27 = vector.load %arg2[%26, %c0_19] : memref<128x256xf32, #tpu.memory_space<vmem>>, vector<1x256xf32>
    %28 = tpu.concatenate %24, %27, %0 in 0 : vector<1x256xf32>, vector<1x256xf32>, vector<6x256xf32> -> vector<8x256xf32>
    %c0_20 = arith.constant 0 : index
    %c4 = arith.constant 4 : index
    %29 = memref.load %arg0[%c0_20, %c4] : memref<2x8xi32, #tpu.memory_space<smem>>
    %30 = arith.index_cast %29 : i32 to index
    %c0_21 = arith.constant 0 : index
    %31 = vector.load %arg2[%30, %c0_21] : memref<128x256xf32, #tpu.memory_space<vmem>>, vector<1x256xf32>
    %c1_22 = arith.constant 1 : index
    %c4_23 = arith.constant 4 : index
    %32 = memref.load %arg0[%c1_22, %c4_23] : memref<2x8xi32, #tpu.memory_space<smem>>
    %33 = arith.index_cast %32 : i32 to index
    %c0_24 = arith.constant 0 : index
    %34 = vector.load %arg2[%33, %c0_24] : memref<128x256xf32, #tpu.memory_space<vmem>>, vector<1x256xf32>
    %35 = tpu.concatenate %31, %34, %0 in 0 : vector<1x256xf32>, vector<1x256xf32>, vector<6x256xf32> -> vector<8x256xf32>
    %c0_25 = arith.constant 0 : index
    %c5 = arith.constant 5 : index
    %36 = memref.load %arg0[%c0_25, %c5] : memref<2x8xi32, #tpu.memory_space<smem>>
    %37 = arith.index_cast %36 : i32 to index
    %c0_26 = arith.constant 0 : index
    %38 = vector.load %arg2[%37, %c0_26] : memref<128x256xf32, #tpu.memory_space<vmem>>, vector<1x256xf32>
    %c1_27 = arith.constant 1 : index
    %c5_28 = arith.constant 5 : index
    %39 = memref.load %arg0[%c1_27, %c5_28] : memref<2x8xi32, #tpu.memory_space<smem>>
    %40 = arith.index_cast %39 : i32 to index
    %c0_29 = arith.constant 0 : index
    %41 = vector.load %arg2[%40, %c0_29] : memref<128x256xf32, #tpu.memory_space<vmem>>, vector<1x256xf32>
    %42 = tpu.concatenate %38, %41, %0 in 0 : vector<1x256xf32>, vector<1x256xf32>, vector<6x256xf32> -> vector<8x256xf32>
    %c0_30 = arith.constant 0 : index
    %c6 = arith.constant 6 : index
    %43 = memref.load %arg0[%c0_30, %c6] : memref<2x8xi32, #tpu.memory_space<smem>>
    %44 = arith.index_cast %43 : i32 to index
    %c0_31 = arith.constant 0 : index
    %45 = vector.load %arg2[%44, %c0_31] : memref<128x256xf32, #tpu.memory_space<vmem>>, vector<1x256xf32>
    %c1_32 = arith.constant 1 : index
    %c6_33 = arith.constant 6 : index
    %46 = memref.load %arg0[%c1_32, %c6_33] : memref<2x8xi32, #tpu.memory_space<smem>>
    %47 = arith.index_cast %46 : i32 to index
    %c0_34 = arith.constant 0 : index
    %48 = vector.load %arg2[%47, %c0_34] : memref<128x256xf32, #tpu.memory_space<vmem>>, vector<1x256xf32>
    %49 = tpu.concatenate %45, %48, %0 in 0 : vector<1x256xf32>, vector<1x256xf32>, vector<6x256xf32> -> vector<8x256xf32>
    %c0_35 = arith.constant 0 : index
    %c7 = arith.constant 7 : index
    %50 = memref.load %arg0[%c0_35, %c7] : memref<2x8xi32, #tpu.memory_space<smem>>
    %51 = arith.index_cast %50 : i32 to index
    %c0_36 = arith.constant 0 : index
    %52 = vector.load %arg2[%51, %c0_36] : memref<128x256xf32, #tpu.memory_space<vmem>>, vector<1x256xf32>
    %c1_37 = arith.constant 1 : index
    %c7_38 = arith.constant 7 : index
    %53 = memref.load %arg0[%c1_37, %c7_38] : memref<2x8xi32, #tpu.memory_space<smem>>
    %54 = arith.index_cast %53 : i32 to index
    %c0_39 = arith.constant 0 : index
    %55 = vector.load %arg2[%54, %c0_39] : memref<128x256xf32, #tpu.memory_space<vmem>>, vector<1x256xf32>
    %56 = tpu.concatenate %52, %55, %0 in 0 : vector<1x256xf32>, vector<1x256xf32>, vector<6x256xf32> -> vector<8x256xf32>
    %c0_40 = arith.constant 0 : index
    %c0_41 = arith.constant 0 : index
    %c0_42 = arith.constant 0 : index
    %57 = vector.load %arg1[%c0_40, %c0_41, %c0_42] : memref<1x2x256xf32, #tpu.memory_space<vmem>>, vector<1x2x256xf32>
    %58 = vector.shape_cast %57 : vector<1x2x256xf32> to vector<2x256xf32>
    %59 = tpu.concatenate %58, %0 in 0 : vector<2x256xf32>, vector<6x256xf32> -> vector<8x256xf32>
    %c0_43 = arith.constant 0 : index
    %c0_44 = arith.constant 0 : index
    %60 = vector.load %arg3[%c0_43, %c0_44] : memref<256x256xbf16, #tpu.memory_space<vmem>>, vector<256x256xbf16>
    %61 = arith.truncf %59 : vector<8x256xf32> to vector<8x256xbf16>
    %cst_45 = arith.constant dense<0.000000e+00> : vector<8x256xf32>
    %62 = tpu.matmul %61, %60, %cst_45 {dimension_numbers = #tpu.dot_dimension_numbers<[1], [0], [0], [1], [0, 0, 1, 1], [], []>} : vector<8x256xbf16>, vector<256x256xbf16>, vector<8x256xf32> -> vector<8x256xf32>
    %63 = arith.addf %7, %62 : vector<8x256xf32>
    %64 = math.tanh %63 : vector<8x256xf32>
    %65 = arith.truncf %64 : vector<8x256xf32> to vector<8x256xbf16>
    %cst_46 = arith.constant dense<0.000000e+00> : vector<8x256xf32>
    %66 = tpu.matmul %65, %60, %cst_46 {dimension_numbers = #tpu.dot_dimension_numbers<[1], [0], [0], [1], [0, 0, 1, 1], [], []>} : vector<8x256xbf16>, vector<256x256xbf16>, vector<8x256xf32> -> vector<8x256xf32>
    %67 = arith.addf %14, %66 : vector<8x256xf32>
    %68 = math.tanh %67 : vector<8x256xf32>
    %69 = arith.truncf %68 : vector<8x256xf32> to vector<8x256xbf16>
    %cst_47 = arith.constant dense<0.000000e+00> : vector<8x256xf32>
    %70 = tpu.matmul %69, %60, %cst_47 {dimension_numbers = #tpu.dot_dimension_numbers<[1], [0], [0], [1], [0, 0, 1, 1], [], []>} : vector<8x256xbf16>, vector<256x256xbf16>, vector<8x256xf32> -> vector<8x256xf32>
    %71 = arith.addf %21, %70 : vector<8x256xf32>
    %72 = math.tanh %71 : vector<8x256xf32>
    %73 = arith.truncf %72 : vector<8x256xf32> to vector<8x256xbf16>
    %cst_48 = arith.constant dense<0.000000e+00> : vector<8x256xf32>
    %74 = tpu.matmul %73, %60, %cst_48 {dimension_numbers = #tpu.dot_dimension_numbers<[1], [0], [0], [1], [0, 0, 1, 1], [], []>} : vector<8x256xbf16>, vector<256x256xbf16>, vector<8x256xf32> -> vector<8x256xf32>
    %75 = arith.addf %28, %74 : vector<8x256xf32>
    %76 = math.tanh %75 : vector<8x256xf32>
    %77 = arith.truncf %76 : vector<8x256xf32> to vector<8x256xbf16>
    %cst_49 = arith.constant dense<0.000000e+00> : vector<8x256xf32>
    %78 = tpu.matmul %77, %60, %cst_49 {dimension_numbers = #tpu.dot_dimension_numbers<[1], [0], [0], [1], [0, 0, 1, 1], [], []>} : vector<8x256xbf16>, vector<256x256xbf16>, vector<8x256xf32> -> vector<8x256xf32>
    %79 = arith.addf %35, %78 : vector<8x256xf32>
    %80 = math.tanh %79 : vector<8x256xf32>
    %81 = arith.truncf %80 : vector<8x256xf32> to vector<8x256xbf16>
    %cst_50 = arith.constant dense<0.000000e+00> : vector<8x256xf32>
    %82 = tpu.matmul %81, %60, %cst_50 {dimension_numbers = #tpu.dot_dimension_numbers<[1], [0], [0], [1], [0, 0, 1, 1], [], []>} : vector<8x256xbf16>, vector<256x256xbf16>, vector<8x256xf32> -> vector<8x256xf32>
    %83 = arith.addf %42, %82 : vector<8x256xf32>
    %84 = math.tanh %83 : vector<8x256xf32>
    %85 = arith.truncf %84 : vector<8x256xf32> to vector<8x256xbf16>
    %cst_51 = arith.constant dense<0.000000e+00> : vector<8x256xf32>
    %86 = tpu.matmul %85, %60, %cst_51 {dimension_numbers = #tpu.dot_dimension_numbers<[1], [0], [0], [1], [0, 0, 1, 1], [], []>} : vector<8x256xbf16>, vector<256x256xbf16>, vector<8x256xf32> -> vector<8x256xf32>
    %87 = arith.addf %49, %86 : vector<8x256xf32>
    %88 = math.tanh %87 : vector<8x256xf32>
    %89 = arith.truncf %88 : vector<8x256xf32> to vector<8x256xbf16>
    %cst_52 = arith.constant dense<0.000000e+00> : vector<8x256xf32>
    %90 = tpu.matmul %89, %60, %cst_52 {dimension_numbers = #tpu.dot_dimension_numbers<[1], [0], [0], [1], [0, 0, 1, 1], [], []>} : vector<8x256xbf16>, vector<256x256xbf16>, vector<8x256xf32> -> vector<8x256xf32>
    %91 = arith.addf %56, %90 : vector<8x256xf32>
    %92 = math.tanh %91 : vector<8x256xf32>
    %93 = vector.extract_strided_slice %92 {offsets = [0, 0], sizes = [2, 256], strides = [1, 1]} : vector<8x256xf32> to vector<2x256xf32>
    %c0_53 = arith.constant 0 : index
    %c0_54 = arith.constant 0 : index
    %c0_55 = arith.constant 0 : index
    %94 = vector.load %arg7[%c0_53, %c0_54, %c0_55] : memref<1x2x256xf32, #tpu.memory_space<vmem>>, vector<1x2x256xf32>
    %95 = vector.shape_cast %94 : vector<1x2x256xf32> to vector<2x256xf32>
    %96 = vector.shape_cast %93 : vector<2x256xf32> to vector<1x2x256xf32>
    tpu.vector_store %arg7[%c0_53, %c0_54, %c0_55], %96 {strides = array<i32>} : memref<1x2x256xf32, #tpu.memory_space<vmem>>, vector<1x2x256xf32>,
    %97 = vector.extract_strided_slice %64 {offsets = [0, 0], sizes = [1, 256], strides = [1, 1]} : vector<8x256xf32> to vector<1x256xf32>
    %98 = vector.extract_strided_slice %68 {offsets = [0, 0], sizes = [1, 256], strides = [1, 1]} : vector<8x256xf32> to vector<1x256xf32>
    %99 = vector.extract_strided_slice %72 {offsets = [0, 0], sizes = [1, 256], strides = [1, 1]} : vector<8x256xf32> to vector<1x256xf32>
    %100 = vector.extract_strided_slice %76 {offsets = [0, 0], sizes = [1, 256], strides = [1, 1]} : vector<8x256xf32> to vector<1x256xf32>
    %101 = vector.extract_strided_slice %80 {offsets = [0, 0], sizes = [1, 256], strides = [1, 1]} : vector<8x256xf32> to vector<1x256xf32>
    %102 = vector.extract_strided_slice %84 {offsets = [0, 0], sizes = [1, 256], strides = [1, 1]} : vector<8x256xf32> to vector<1x256xf32>
    %103 = vector.extract_strided_slice %88 {offsets = [0, 0], sizes = [1, 256], strides = [1, 1]} : vector<8x256xf32> to vector<1x256xf32>
    %104 = vector.extract_strided_slice %92 {offsets = [0, 0], sizes = [1, 256], strides = [1, 1]} : vector<8x256xf32> to vector<1x256xf32>
    %105 = vector.extract_strided_slice %64 {offsets = [1, 0], sizes = [1, 256], strides = [1, 1]} : vector<8x256xf32> to vector<1x256xf32>
    %106 = vector.extract_strided_slice %68 {offsets = [1, 0], sizes = [1, 256], strides = [1, 1]} : vector<8x256xf32> to vector<1x256xf32>
    %107 = vector.extract_strided_slice %72 {offsets = [1, 0], sizes = [1, 256], strides = [1, 1]} : vector<8x256xf32> to vector<1x256xf32>
    %108 = vector.extract_strided_slice %76 {offsets = [1, 0], sizes = [1, 256], strides = [1, 1]} : vector<8x256xf32> to vector<1x256xf32>
    %109 = vector.extract_strided_slice %80 {offsets = [1, 0], sizes = [1, 256], strides = [1, 1]} : vector<8x256xf32> to vector<1x256xf32>
    %110 = vector.extract_strided_slice %84 {offsets = [1, 0], sizes = [1, 256], strides = [1, 1]} : vector<8x256xf32> to vector<1x256xf32>
    %111 = vector.extract_strided_slice %88 {offsets = [1, 0], sizes = [1, 256], strides = [1, 1]} : vector<8x256xf32> to vector<1x256xf32>
    %112 = vector.extract_strided_slice %92 {offsets = [1, 0], sizes = [1, 256], strides = [1, 1]} : vector<8x256xf32> to vector<1x256xf32>
    %113 = tpu.concatenate %97, %98, %99, %100, %101, %102, %103, %104, %105, %106, %107, %108, %109, %110, %111, %112 in 0 : vector<1x256xf32>, vector<1x256xf32>, vector<1x256xf32>, vector<1x256xf32>, vector<1x256xf32>, vector<1x256xf32>, vector<1x256xf32>, vector<1x256xf32>, vector<1x256xf32>, vector<1x256xf32>, vector<1x256xf32>, vector<1x256xf32>, vector<1x256xf32>, vector<1x256xf32>, vector<1x256xf32>, vector<1x256xf32> -> vector<16x256xf32>
    %114 = arith.truncf %113 : vector<16x256xf32> to vector<16x256xbf16>
    %c0_56 = arith.constant 0 : index
    %c0_57 = arith.constant 0 : index
    %115 = vector.load %arg4[%c0_56, %c0_57] : memref<256x128xbf16, #tpu.memory_space<vmem>>, vector<256x128xbf16>
    %cst_58 = arith.constant dense<0.000000e+00> : vector<16x128xf32>
    %116 = tpu.matmul %114, %115, %cst_58 {dimension_numbers = #tpu.dot_dimension_numbers<[1], [0], [0], [1], [0, 0, 1, 1], [], []>} : vector<16x256xbf16>, vector<256x128xbf16>, vector<16x128xf32> -> vector<16x128xf32>
    %c0_59 = arith.constant 0 : index
    %c0_60 = arith.constant 0 : index
    %117 = vector.load %arg5[%c0_59, %c0_60] : memref<1x128xf32, #tpu.memory_space<vmem>>, vector<1x128xf32>
    %118 = vector.broadcast %117 : vector<1x128xf32> to vector<16x128xf32>
    %119 = arith.addf %116, %118 : vector<16x128xf32>
    %c0_61 = arith.constant 0 : index
    %c0_62 = arith.constant 0 : index
    %120 = vector.load %arg6[%c0_61, %c0_62] : memref<16x128xf32, #tpu.memory_space<vmem>>, vector<16x128xf32>
    tpu.vector_store %arg6[%c0_61, %c0_62], %119 {strides = array<i32>} : memref<16x128xf32, #tpu.memory_space<vmem>>, vector<16x128xf32>,
    return
  }
}

</mosaic_0001>

<llo_original>
// kernel: text_generator_forward.1
$region0: #{text_generator_forward.1}
  #allocation0 [shape = 'u32[]', space=smem, size = 0x4, offset = 0x4, fixed_abs, tag = 'smem constant byte address 0x4 - core index']
  #allocation1 [shape = 'u32[144,128]{1,0:T(1,128)}', space=vmem, size = 0x12000, scoped, tag = 'internal scratch']
  %s0 = inlined_call_operand.hbm [shape: s32[2,8], index: 0, kind: input, shape index: {}]
  %s1 = inlined_call_operand.hbm [shape: f32[1,2,256], index: 1, kind: input, shape index: {}]
  %s2 = inlined_call_operand.hbm [shape: f32[128,256], index: 2, kind: input, shape index: {}]
  %s3 = inlined_call_operand.hbm [shape: bf16[256,256], index: 3, kind: input, shape index: {}]
  %s4 = inlined_call_operand.hbm [shape: bf16[256,128], index: 4, kind: input, shape index: {}]
  %s5 = inlined_call_operand.vmem [shape: f32[1,128], index: 5, kind: input, shape index: {}]
  %s6 = inlined_call_operand.hbm [shape: f32[16,128], index: 6, kind: output, shape index: {0}]
  %s7 = inlined_call_operand.hbm [shape: f32[1,2,256], index: 7, kind: output, shape index: {1}]
  %8 = xla_tuple %s6, %s7
  %s9 = sld [smem:[#allocation0]]
  $region62: #{text_generator_forward.1} parent=0
    _
  %s11 = ssub.s32 1, %s9
  %s12 = scalar_select 0, %s11, %s9
  $region1: #{text_generator_forward.1} parent=0
    #allocation2 [shape = 'u8[1024]{0}', space=smem, size = 0x400, scoped, tag = 'input window, operand 0, single buffered']
    #allocation3 [shape = 's32[1]{0}', space=sflag, size = 0x4, scoped, tag = 'scoped memory for text_generator_forward.1']
    #allocation4 [shape = 's32[1]{0}', space=sflag, size = 0x4, scoped, tag = 'scoped memory for text_generator_forward.1']
    #allocation5 [shape = 's32[1]{0}', space=sflag, size = 0x4, scoped, tag = 'scoped memory for text_generator_forward.1']
    #allocation6 [shape = 'u8[2048]{0}', space=vmem, size = 0x800, scoped, tag = 'input window, operand 1, single buffered']
    #allocation7 [shape = 'u8[131072]{0}', space=vmem, size = 0x20000, scoped, tag = 'input window, operand 2, single buffered']
    #allocation8 [shape = 's32[1]{0}', space=sflag, size = 0x4, scoped, tag = 'scoped memory for text_generator_forward.1']
    #allocation9 [shape = 'u8[131072]{0}', space=vmem, size = 0x20000, scoped, tag = 'input window, operand 3, single buffered']
    #allocation10 [shape = 'u8[65536]{0}', space=vmem, size = 0x10000, scoped, tag = 'input window, operand 4, single buffered']
    #allocation11 [shape = 's32[1]{0}', space=sflag, size = 0x4, scoped, tag = 'scoped memory for text_generator_forward.1']
    #allocation12 [shape = 'u8[8192]{0}', space=vmem, size = 0x2000, scoped, tag = 'output window, operand 0, single buffered']
    #allocation13 [shape = 'u8[2048]{0}', space=vmem, size = 0x800, scoped, tag = 'output window, operand 1, single buffered']
    #allocation14 [shape = 's32[1]{0}', space=sflag, size = 0x4, scoped, tag = 'scoped memory for text_generator_forward.1']
    %13 = vsyncpa [#allocation5], 0
    %14 = vsyncpa [#allocation3], 0
    %15 = vsyncpa [#allocation8], 0
    %16 = vsyncpa [#allocation11], 0
    %17 = vsyncpa [#allocation4], 0
    %18 = vsyncpa [#allocation14], 0
    // Predicated region
    $region2: #{text_generator_forward.1} parent=1 // pred_check
      _
    $region3: #{text_generator_forward.1} parent=1 // pred_check_branch
      %20 = sbr.rel (0) target = $region5
    $region4: #{text_generator_forward.1} parent=1 // pred_region
      %s22 = ssub.s32 32, 32
      %23 = vsyncadd [#allocation5], %s22
      %26 = dma.hbm_to_smem %s0, 32, [#allocation2], [#allocation5]
    $region5: #{text_generator_forward.1} parent=1 // pred_fallthru
      _
    // Predicated region
    $region6: #{text_generator_forward.1} parent=1 // pred_check
      _
    $region7: #{text_generator_forward.1} parent=1 // pred_check_branch
      %28 = sbr.rel (0) target = $region9
    $region8: #{text_generator_forward.1} parent=1 // pred_region
      %s30 = ssub.s32 64, 64
      %31 = vsyncadd [#allocation3], %s30
      %s33 = sshll.u32 [#allocation6], 4
      %s34 = int_to_ptr.vmem [resolvable:$true] %s33
      %36 = dma.hbm_to_vmem [thread:$0]  %s1, 64, %s34, [#allocation3]
    $region9: #{text_generator_forward.1} parent=1 // pred_fallthru
      _
    // Predicated region
    $region10: #{text_generator_forward.1} parent=1 // pred_check
      _
    $region11: #{text_generator_forward.1} parent=1 // pred_check_branch
      %38 = sbr.rel (0) target = $region13
    $region12: #{text_generator_forward.1} parent=1 // pred_region
      %s40 = ssub.s32 4096, 4096
      %41 = vsyncadd [#allocation8], %s40
      %s42 = sshll.u32 [#allocation7], 4
      %s43 = int_to_ptr.vmem [resolvable:$true] %s42
      %48 = dma.hbm_to_vmem [thread:$0]  %s2, 4096, %s43, [#allocation8], 256, 256, 16
    $region13: #{text_generator_forward.1} parent=1 // pred_fallthru
      _
    // Predicated region
    $region14: #{text_generator_forward.1} parent=1 // pred_check
      _
    $region15: #{text_generator_forward.1} parent=1 // pred_check_branch
      %50 = sbr.rel (0) target = $region17
    $region16: #{text_generator_forward.1} parent=1 // pred_region
      %s52 = ssub.s32 4096, 4096
      %53 = vsyncadd [#allocation8], %s52
      %s54 = sshll.u32 [#allocation9], 4
      %s55 = int_to_ptr.vmem [resolvable:$true] %s54
      %60 = dma.hbm_to_vmem [thread:$0]  %s3, 4096, %s55, [#allocation8], 128, 128, 8
    $region17: #{text_generator_forward.1} parent=1 // pred_fallthru
      _
    // Predicated region
    $region18: #{text_generator_forward.1} parent=1 // pred_check
      _
    $region19: #{text_generator_forward.1} parent=1 // pred_check_branch
      %62 = sbr.rel (0) target = $region21
    $region20: #{text_generator_forward.1} parent=1 // pred_region
      %s64 = ssub.s32 2048, 2048
      %65 = vsyncadd [#allocation11], %s64
      %s66 = sshll.u32 [#allocation10], 4
      %s67 = int_to_ptr.vmem [resolvable:$true] %s66
      %72 = dma.hbm_to_vmem [thread:$0]  %s4, 2048, %s67, [#allocation11], 64, 64, 4
    $region21: #{text_generator_forward.1} parent=1 // pred_fallthru
      _
    // Predicated region
    $region22: #{text_generator_forward.1} parent=1 // pred_check
      _
    $region23: #{text_generator_forward.1} parent=1 // pred_check_branch
      %74 = sbr.rel (0) target = $region25
    $region24: #{text_generator_forward.1} parent=1 // pred_region
      _
    $region25: #{text_generator_forward.1} parent=1 // pred_fallthru
      _
    // Predicated region
    $region26: #{text_generator_forward.1} parent=1 // pred_check
      _
    $region27: #{text_generator_forward.1} parent=1 // pred_check_branch
      %76 = sbr.rel (0) target = $region29
    $region28: #{text_generator_forward.1} parent=1 // pred_region
      %77 = dma.done [#allocation5], 32
    $region29: #{text_generator_forward.1} parent=1 // pred_fallthru
      _
    // Predicated region
    $region30: #{text_generator_forward.1} parent=1 // pred_check
      _
    $region31: #{text_generator_forward.1} parent=1 // pred_check_branch
      %79 = sbr.rel (0) target = $region33
    $region32: #{text_generator_forward.1} parent=1 // pred_region
      %80 = dma.done [#allocation3], 64
    $region33: #{text_generator_forward.1} parent=1 // pred_fallthru
      _
    // Predicated region
    $region34: #{text_generator_forward.1} parent=1 // pred_check
      _
    $region35: #{text_generator_forward.1} parent=1 // pred_check_branch
      %82 = sbr.rel (0) target = $region37
    $region36: #{text_generator_forward.1} parent=1 // pred_region
      %83 = dma.done [#allocation8], 4096
    $region37: #{text_generator_forward.1} parent=1 // pred_fallthru
      _
    // Predicated region
    $region38: #{text_generator_forward.1} parent=1 // pred_check
      _
    $region39: #{text_generator_forward.1} parent=1 // pred_check_branch
      %85 = sbr.rel (0) target = $region41
    $region40: #{text_generator_forward.1} parent=1 // pred_region
      %86 = dma.done [#allocation8], 4096
    $region41: #{text_generator_forward.1} parent=1 // pred_fallthru
      _
    // Predicated region
    $region42: #{text_generator_forward.1} parent=1 // pred_check
      _
    $region43: #{text_generator_forward.1} parent=1 // pred_check_branch
      %88 = sbr.rel (0) target = $region45
    $region44: #{text_generator_forward.1} parent=1 // pred_region
      %89 = dma.done [#allocation11], 2048
    $region45: #{text_generator_forward.1} parent=1 // pred_fallthru
      _
    %90 = sfence
    %s92 = sld [smem:[#allocation2]]
    %s93 = sshra.s32 %s92, 3
    %s94 = sand.u32 %s92, 7
    %s95 = sshra.s32 %s92, 3
    %s96 = sand.u32 %s92, 7
    %s97 = smul.u32 %s93, 2
    %s98 = smul.u32 %s97, 8
    %s99 = sadd.s32 %s98, %s96
    %s100 = scalar_lea.vmem [#allocation7], %s99
    %v101 = vld [vmem:[%s100] ss:$8 sm:$0x3]
    %s102 = sld [smem:[#allocation2 + $0x80]]
    %s103 = sshra.s32 %s102, 3
    %s104 = sand.u32 %s102, 7
    %s105 = sshra.s32 %s102, 3
    %s106 = sand.u32 %s102, 7
    %s107 = smul.u32 %s103, 2
    %s108 = smul.u32 %s107, 8
    %s109 = sadd.s32 %s108, %s106
    %s110 = scalar_lea.vmem [#allocation7], %s109
    %v111 = vld [vmem:[%s110] ss:$8 sm:$0x3]
    %v113 = vlaneseq
    %v114 = vshrl.u32 %v113, 7
    %v115 = vsub.s32 0, %v114
    %v116 = vrot.slane %v101, %v115
    %v117 = vlaneseq
    %v118 = vshrl.u32 %v117, 7
    %v119 = vsub.s32 1, %v118
    %v120 = vrot.slane %v101, %v119
    %v124 = vlaneseq
    %v125 = vshrl.u32 %v124, 7
    %v126 = vsub.s32 0, %v125
    %v127 = vrot.slane %v111, %v126
    %v128 = vlaneseq
    %v129 = vshrl.u32 %v128, 7
    %v130 = vsub.s32 1, %v129
    %v131 = vrot.slane %v111, %v130
    %vm134 = vcmask 1040384
    %v135 = vsel %vm134, %v116, %v127
    %v136 = vsel %vm134, %v120, %v131
    %vm137 = vcmask 1041408
    %v138 = vsel %vm137, %v135, 0.0
    %v139 = vsel %vm137, %v136, 0.0
    %s140 = sld [smem:[#allocation2 + $0x1]]
    %s141 = sshra.s32 %s140, 3
    %s142 = sand.u32 %s140, 7
    %s143 = sshra.s32 %s140, 3
    %s144 = sand.u32 %s140, 7
    %s145 = smul.u32 %s141, 2
    %s146 = smul.u32 %s145, 8
    %s147 = sadd.s32 %s146, %s144
    %s148 = scalar_lea.vmem [#allocation7], %s147
    %v149 = vld [vmem:[%s148] ss:$8 sm:$0x3]
    %s150 = sld [smem:[#allocation2 + $0x81]]
    %s151 = sshra.s32 %s150, 3
    %s152 = sand.u32 %s150, 7
    %s153 = sshra.s32 %s150, 3
    %s154 = sand.u32 %s150, 7
    %s155 = smul.u32 %s151, 2
    %s156 = smul.u32 %s155, 8
    %s157 = sadd.s32 %s156, %s154
    %s158 = scalar_lea.vmem [#allocation7], %s157
    %v159 = vld [vmem:[%s158] ss:$8 sm:$0x3]
    %v161 = vlaneseq
    %v162 = vshrl.u32 %v161, 7
    %v163 = vsub.s32 0, %v162
    %v164 = vrot.slane %v149, %v163
    %v165 = vlaneseq
    %v166 = vshrl.u32 %v165, 7
    %v167 = vsub.s32 1, %v166
    %v168 = vrot.slane %v149, %v167
    %v172 = vlaneseq
    %v173 = vshrl.u32 %v172, 7
    %v174 = vsub.s32 0, %v173
    %v175 = vrot.slane %v159, %v174
    %v176 = vlaneseq
    %v177 = vshrl.u32 %v176, 7
    %v178 = vsub.s32 1, %v177
    %v179 = vrot.slane %v159, %v178
    %v182 = vsel %vm134, %v164, %v175
    %v183 = vsel %vm134, %v168, %v179
    %v184 = vsel %vm137, %v182, 0.0
    %v185 = vsel %vm137, %v183, 0.0
    %s186 = sld [smem:[#allocation2 + $0x2]]
    %s187 = sshra.s32 %s186, 3
    %s188 = sand.u32 %s186, 7
    %s189 = sshra.s32 %s186, 3
    %s190 = sand.u32 %s186, 7
    %s191 = smul.u32 %s187, 2
    %s192 = smul.u32 %s191, 8
    %s193 = sadd.s32 %s192, %s190
    %s194 = scalar_lea.vmem [#allocation7], %s193
    %v195 = vld [vmem:[%s194] ss:$8 sm:$0x3]
    %s196 = sld [smem:[#allocation2 + $0x82]]
    %s197 = sshra.s32 %s196, 3
    %s198 = sand.u32 %s196, 7
    %s199 = sshra.s32 %s196, 3
    %s200 = sand.u32 %s196, 7
    %s201 = smul.u32 %s197, 2
    %s202 = smul.u32 %s201, 8
    %s203 = sadd.s32 %s202, %s200
    %s204 = scalar_lea.vmem [#allocation7], %s203
    %v205 = vld [vmem:[%s204] ss:$8 sm:$0x3]
    %v207 = vlaneseq
    %v208 = vshrl.u32 %v207, 7
    %v209 = vsub.s32 0, %v208
    %v210 = vrot.slane %v195, %v209
    %v211 = vlaneseq
    %v212 = vshrl.u32 %v211, 7
    %v213 = vsub.s32 1, %v212
    %v214 = vrot.slane %v195, %v213
    %v218 = vlaneseq
    %v219 = vshrl.u32 %v218, 7
    %v220 = vsub.s32 0, %v219
    %v221 = vrot.slane %v205, %v220
    %v222 = vlaneseq
    %v223 = vshrl.u32 %v222, 7
    %v224 = vsub.s32 1, %v223
    %v225 = vrot.slane %v205, %v224
    %v228 = vsel %vm134, %v210, %v221
    %v229 = vsel %vm134, %v214, %v225
    %v230 = vsel %vm137, %v228, 0.0
    %v231 = vsel %vm137, %v229, 0.0
    %s232 = sld [smem:[#allocation2 + $0x3]]
    %s233 = sshra.s32 %s232, 3
    %s234 = sand.u32 %s232, 7
    %s235 = sshra.s32 %s232, 3
    %s236 = sand.u32 %s232, 7
    %s237 = smul.u32 %s233, 2
    %s238 = smul.u32 %s237, 8
    %s239 = sadd.s32 %s238, %s236
    %s240 = scalar_lea.vmem [#allocation7], %s239
    %v241 = vld [vmem:[%s240] ss:$8 sm:$0x3]
    %s242 = sld [smem:[#allocation2 + $0x83]]
    %s243 = sshra.s32 %s242, 3
    %s244 = sand.u32 %s242, 7
    %s245 = sshra.s32 %s242, 3
    %s246 = sand.u32 %s242, 7
    %s247 = smul.u32 %s243, 2
    %s248 = smul.u32 %s247, 8
    %s249 = sadd.s32 %s248, %s246
    %s250 = scalar_lea.vmem [#allocation7], %s249
    %v251 = vld [vmem:[%s250] ss:$8 sm:$0x3]
    %v253 = vlaneseq
    %v254 = vshrl.u32 %v253, 7
    %v255 = vsub.s32 0, %v254
    %v256 = vrot.slane %v241, %v255
    %v257 = vlaneseq
    %v258 = vshrl.u32 %v257, 7
    %v259 = vsub.s32 1, %v258
    %v260 = vrot.slane %v241, %v259
    %v264 = vlaneseq
    %v265 = vshrl.u32 %v264, 7
    %v266 = vsub.s32 0, %v265
    %v267 = vrot.slane %v251, %v266
    %v268 = vlaneseq
    %v269 = vshrl.u32 %v268, 7
    %v270 = vsub.s32 1, %v269
    %v271 = vrot.slane %v251, %v270
    %v274 = vsel %vm134, %v256, %v267
    %v275 = vsel %vm134, %v260, %v271
    %v276 = vsel %vm137, %v274, 0.0
    %v277 = vsel %vm137, %v275, 0.0
    %s278 = sld [smem:[#allocation2 + $0x4]]
    %s279 = sshra.s32 %s278, 3
    %s280 = sand.u32 %s278, 7
    %s281 = sshra.s32 %s278, 3
    %s282 = sand.u32 %s278, 7
    %s283 = smul.u32 %s279, 2
    %s284 = smul.u32 %s283, 8
    %s285 = sadd.s32 %s284, %s282
    %s286 = scalar_lea.vmem [#allocation7], %s285
    %v287 = vld [vmem:[%s286] ss:$8 sm:$0x3]
    %s288 = sld [smem:[#allocation2 + $0x84]]
    %s289 = sshra.s32 %s288, 3
    %s290 = sand.u32 %s288, 7
    %s291 = sshra.s32 %s288, 3
    %s292 = sand.u32 %s288, 7
    %s293 = smul.u32 %s289, 2
    %s294 = smul.u32 %s293, 8
    %s295 = sadd.s32 %s294, %s292
    %s296 = scalar_lea.vmem [#allocation7], %s295
    %v297 = vld [vmem:[%s296] ss:$8 sm:$0x3]
    %v299 = vlaneseq
    %v300 = vshrl.u32 %v299, 7
    %v301 = vsub.s32 0, %v300
    %v302 = vrot.slane %v287, %v301
    %v303 = vlaneseq
    %v304 = vshrl.u32 %v303, 7
    %v305 = vsub.s32 1, %v304
    %v306 = vrot.slane %v287, %v305
    %v310 = vlaneseq
    %v311 = vshrl.u32 %v310, 7
    %v312 = vsub.s32 0, %v311
    %v313 = vrot.slane %v297, %v312
    %v314 = vlaneseq
    %v315 = vshrl.u32 %v314, 7
    %v316 = vsub.s32 1, %v315
    %v317 = vrot.slane %v297, %v316
    %v320 = vsel %vm134, %v302, %v313
    %v321 = vsel %vm134, %v306, %v317
    %v322 = vsel %vm137, %v320, 0.0
    %v323 = vsel %vm137, %v321, 0.0
    %s324 = sld [smem:[#allocation2 + $0x5]]
    %s325 = sshra.s32 %s324, 3
    %s326 = sand.u32 %s324, 7
    %s327 = sshra.s32 %s324, 3
    %s328 = sand.u32 %s324, 7
    %s329 = smul.u32 %s325, 2
    %s330 = smul.u32 %s329, 8
    %s331 = sadd.s32 %s330, %s328
    %s332 = scalar_lea.vmem [#allocation7], %s331
    %v333 = vld [vmem:[%s332] ss:$8 sm:$0x3]
    %s334 = sld [smem:[#allocation2 + $0x85]]
    %s335 = sshra.s32 %s334, 3
    %s336 = sand.u32 %s334, 7
    %s337 = sshra.s32 %s334, 3
    %s338 = sand.u32 %s334, 7
    %s339 = smul.u32 %s335, 2
    %s340 = smul.u32 %s339, 8
    %s341 = sadd.s32 %s340, %s338
    %s342 = scalar_lea.vmem [#allocation7], %s341
    %v343 = vld [vmem:[%s342] ss:$8 sm:$0x3]
    %v345 = vlaneseq
    %v346 = vshrl.u32 %v345, 7
    %v347 = vsub.s32 0, %v346
    %v348 = vrot.slane %v333, %v347
    %v349 = vlaneseq
    %v350 = vshrl.u32 %v349, 7
    %v351 = vsub.s32 1, %v350
    %v352 = vrot.slane %v333, %v351
    %v356 = vlaneseq
    %v357 = vshrl.u32 %v356, 7
    %v358 = vsub.s32 0, %v357
    %v359 = vrot.slane %v343, %v358
    %v360 = vlaneseq
    %v361 = vshrl.u32 %v360, 7
    %v362 = vsub.s32 1, %v361
    %v363 = vrot.slane %v343, %v362
    %v366 = vsel %vm134, %v348, %v359
    %v367 = vsel %vm134, %v352, %v363
    %v368 = vsel %vm137, %v366, 0.0
    %v369 = vsel %vm137, %v367, 0.0
    %s370 = sld [smem:[#allocation2 + $0x6]]
    %s371 = sshra.s32 %s370, 3
    %s372 = sand.u32 %s370, 7
    %s373 = sshra.s32 %s370, 3
    %s374 = sand.u32 %s370, 7
    %s375 = smul.u32 %s371, 2
    %s376 = smul.u32 %s375, 8
    %s377 = sadd.s32 %s376, %s374
    %s378 = scalar_lea.vmem [#allocation7], %s377
    %v379 = vld [vmem:[%s378] ss:$8 sm:$0x3]
    %s380 = sld [smem:[#allocation2 + $0x86]]
    %s381 = sshra.s32 %s380, 3
    %s382 = sand.u32 %s380, 7
    %s383 = sshra.s32 %s380, 3
    %s384 = sand.u32 %s380, 7
    %s385 = smul.u32 %s381, 2
    %s386 = smul.u32 %s385, 8
    %s387 = sadd.s32 %s386, %s384
    %s388 = scalar_lea.vmem [#allocation7], %s387
    %v389 = vld [vmem:[%s388] ss:$8 sm:$0x3]
    %v391 = vlaneseq
    %v392 = vshrl.u32 %v391, 7
    %v393 = vsub.s32 0, %v392
    %v394 = vrot.slane %v379, %v393
    %v395 = vlaneseq
    %v396 = vshrl.u32 %v395, 7
    %v397 = vsub.s32 1, %v396
    %v398 = vrot.slane %v379, %v397
    %v402 = vlaneseq
    %v403 = vshrl.u32 %v402, 7
    %v404 = vsub.s32 0, %v403
    %v405 = vrot.slane %v389, %v404
    %v406 = vlaneseq
    %v407 = vshrl.u32 %v406, 7
    %v408 = vsub.s32 1, %v407
    %v409 = vrot.slane %v389, %v408
    %v412 = vsel %vm134, %v394, %v405
    %v413 = vsel %vm134, %v398, %v409
    %v414 = vsel %vm137, %v412, 0.0
    %v415 = vsel %vm137, %v413, 0.0
    %s416 = sld [smem:[#allocation2 + $0x7]]
    %s417 = sshra.s32 %s416, 3
    %s418 = sand.u32 %s416, 7
    %s419 = sshra.s32 %s416, 3
    %s420 = sand.u32 %s416, 7
    %s421 = smul.u32 %s417, 2
    %s422 = smul.u32 %s421, 8
    %s423 = sadd.s32 %s422, %s420
    %s424 = scalar_lea.vmem [#allocation7], %s423
    %v425 = vld [vmem:[%s424] ss:$8 sm:$0x3]
    %s426 = sld [smem:[#allocation2 + $0x87]]
    %s427 = sshra.s32 %s426, 3
    %s428 = sand.u32 %s426, 7
    %s429 = sshra.s32 %s426, 3
    %s430 = sand.u32 %s426, 7
    %s431 = smul.u32 %s427, 2
    %s432 = smul.u32 %s431, 8
    %s433 = sadd.s32 %s432, %s430
    %s434 = scalar_lea.vmem [#allocation7], %s433
    %v435 = vld [vmem:[%s434] ss:$8 sm:$0x3]
    %v437 = vlaneseq
    %v438 = vshrl.u32 %v437, 7
    %v439 = vsub.s32 0, %v438
    %v440 = vrot.slane %v425, %v439
    %v441 = vlaneseq
    %v442 = vshrl.u32 %v441, 7
    %v443 = vsub.s32 1, %v442
    %v444 = vrot.slane %v425, %v443
    %v448 = vlaneseq
    %v449 = vshrl.u32 %v448, 7
    %v450 = vsub.s32 0, %v449
    %v451 = vrot.slane %v435, %v450
    %v452 = vlaneseq
    %v453 = vshrl.u32 %v452, 7
    %v454 = vsub.s32 1, %v453
    %v455 = vrot.slane %v435, %v454
    %v458 = vsel %vm134, %v440, %v451
    %v459 = vsel %vm134, %v444, %v455
    %v460 = vsel %vm137, %v458, 0.0
    %v461 = vsel %vm137, %v459, 0.0
    %v462 = vld [vmem:[#allocation6] sm:$0xf]
    %v465 = vunpack.c.l.s4 1983009808
    %v466 = vunpack.c.0.s8 %v465
    %v467 = vlaneseq
    %v468 = vshrl.u32 %v467, 7
    %v469 = vsub.s32 %v466, %v468
    %v470 = vrot.slane %v462, %v469
    %v471 = vcombine.high %v470, %v470
    %v474 = vsel %vm137, %v470, 0.0
    %v475 = vsel %vm137, %v471, 0.0
    %v476 = vld [vmem:[#allocation9] sm:$0xff]
    %v477 = vld [vmem:[#allocation9 + $0x8] sm:$0xff]
    %v478 = vld [vmem:[#allocation9 + $0x10] sm:$0xff]
    %v479 = vld [vmem:[#allocation9 + $0x18] sm:$0xff]
    %v480 = vld [vmem:[#allocation9 + $0x20] sm:$0xff]
    %v481 = vld [vmem:[#allocation9 + $0x28] sm:$0xff]
    %v482 = vld [vmem:[#allocation9 + $0x30] sm:$0xff]
    %v483 = vld [vmem:[#allocation9 + $0x38] sm:$0xff]
    %v484 = vld [vmem:[#allocation9 + $0x40] sm:$0xff]
    %v485 = vld [vmem:[#allocation9 + $0x48] sm:$0xff]
    %v486 = vld [vmem:[#allocation9 + $0x50] sm:$0xff]
    %v487 = vld [vmem:[#allocation9 + $0x58] sm:$0xff]
    %v488 = vld [vmem:[#allocation9 + $0x60] sm:$0xff]
    %v489 = vld [vmem:[#allocation9 + $0x68] sm:$0xff]
    %v490 = vld [vmem:[#allocation9 + $0x70] sm:$0xff]
    %v491 = vld [vmem:[#allocation9 + $0x78] sm:$0xff]
    %v492 = vld [vmem:[#allocation9 + $0x80] sm:$0xff]
    %v493 = vld [vmem:[#allocation9 + $0x88] sm:$0xff]
    %v494 = vld [vmem:[#allocation9 + $0x90] sm:$0xff]
    %v495 = vld [vmem:[#allocation9 + $0x98] sm:$0xff]
    %v496 = vld [vmem:[#allocation9 + $0xa0] sm:$0xff]
    %v497 = vld [vmem:[#allocation9 + $0xa8] sm:$0xff]
    %v498 = vld [vmem:[#allocation9 + $0xb0] sm:$0xff]
    %v499 = vld [vmem:[#allocation9 + $0xb8] sm:$0xff]
    %v500 = vld [vmem:[#allocation9 + $0xc0] sm:$0xff]
    %v501 = vld [vmem:[#allocation9 + $0xc8] sm:$0xff]
    %v502 = vld [vmem:[#allocation9 + $0xd0] sm:$0xff]
    %v503 = vld [vmem:[#allocation9 + $0xd8] sm:$0xff]
    %v504 = vld [vmem:[#allocation9 + $0xe0] sm:$0xff]
    %v505 = vld [vmem:[#allocation9 + $0xe8] sm:$0xff]
    %v506 = vld [vmem:[#allocation9 + $0xf0] sm:$0xff]
    %v507 = vld [vmem:[#allocation9 + $0xf8] sm:$0xff]
    %v508 = vpack.c.bf16 %v474, %v474
    %v509 = vpack.c.bf16 %v475, %v475
    %v542 = vunpack.c.l.b16 %v476
    %v543 = vunpack.c.h.b16 %v476
    %v544 = vunpack.c.l.b16 %v477
    %v545 = vunpack.c.h.b16 %v477
    %v546 = vunpack.c.l.b16 %v478
    %v547 = vunpack.c.h.b16 %v478
    %v548 = vunpack.c.l.b16 %v479
    %v549 = vunpack.c.h.b16 %v479
    %v550 = vunpack.c.l.b16 %v480
    %v551 = vunpack.c.h.b16 %v480
    %v552 = vunpack.c.l.b16 %v481
    %v553 = vunpack.c.h.b16 %v481
    %v554 = vunpack.c.l.b16 %v482
    %v555 = vunpack.c.h.b16 %v482
    %v556 = vunpack.c.l.b16 %v483
    %v557 = vunpack.c.h.b16 %v483
    %v558 = vunpack.c.l.b16 %v484
    %v559 = vunpack.c.h.b16 %v484
    %v560 = vunpack.c.l.b16 %v485
    %v561 = vunpack.c.h.b16 %v485
    %v562 = vunpack.c.l.b16 %v486
    %v563 = vunpack.c.h.b16 %v486
    %v564 = vunpack.c.l.b16 %v487
    %v565 = vunpack.c.h.b16 %v487
    %v566 = vunpack.c.l.b16 %v488
    %v567 = vunpack.c.h.b16 %v488
    %v568 = vunpack.c.l.b16 %v489
    %v569 = vunpack.c.h.b16 %v489
    %v570 = vunpack.c.l.b16 %v490
    %v571 = vunpack.c.h.b16 %v490
    %v572 = vunpack.c.l.b16 %v491
    %v573 = vunpack.c.h.b16 %v491
    %v574 = vunpack.c.l.b16 %v492
    %v575 = vunpack.c.h.b16 %v492
    %v576 = vunpack.c.l.b16 %v493
    %v577 = vunpack.c.h.b16 %v493
    %v578 = vunpack.c.l.b16 %v494
    %v579 = vunpack.c.h.b16 %v494
    %v580 = vunpack.c.l.b16 %v495
    %v581 = vunpack.c.h.b16 %v495
    %v582 = vunpack.c.l.b16 %v496
    %v583 = vunpack.c.h.b16 %v496
    %v584 = vunpack.c.l.b16 %v497
    %v585 = vunpack.c.h.b16 %v497
    %v586 = vunpack.c.l.b16 %v498
    %v587 = vunpack.c.h.b16 %v498
    %v588 = vunpack.c.l.b16 %v499
    %v589 = vunpack.c.h.b16 %v499
    %v590 = vunpack.c.l.b16 %v500
    %v591 = vunpack.c.h.b16 %v500
    %v592 = vunpack.c.l.b16 %v501
    %v593 = vunpack.c.h.b16 %v501
    %v594 = vunpack.c.l.b16 %v502
    %v595 = vunpack.c.h.b16 %v502
    %v596 = vunpack.c.l.b16 %v503
    %v597 = vunpack.c.h.b16 %v503
    %v598 = vunpack.c.l.b16 %v504
    %v599 = vunpack.c.h.b16 %v504
    %v600 = vunpack.c.l.b16 %v505
    %v601 = vunpack.c.h.b16 %v505
    %v602 = vunpack.c.l.b16 %v506
    %v603 = vunpack.c.h.b16 %v506
    %v604 = vunpack.c.l.b16 %v507
    %v605 = vunpack.c.h.b16 %v507
    %v606 = vpack.c.b16 %v544, %v542
    %v607 = vpack.c.b16 %v545, %v543
    %v608 = vpack.c.b16 %v548, %v546
    %v609 = vpack.c.b16 %v549, %v547
    %v610 = vpack.c.b16 %v552, %v550
    %v611 = vpack.c.b16 %v553, %v551
    %v612 = vpack.c.b16 %v556, %v554
    %v613 = vpack.c.b16 %v557, %v555
    %v614 = vpack.c.b16 %v560, %v558
    %v615 = vpack.c.b16 %v561, %v559
    %v616 = vpack.c.b16 %v564, %v562
    %v617 = vpack.c.b16 %v565, %v563
    %v618 = vpack.c.b16 %v568, %v566
    %v619 = vpack.c.b16 %v569, %v567
    %v620 = vpack.c.b16 %v572, %v570
    %v621 = vpack.c.b16 %v573, %v571
    %v622 = vpack.c.b16 %v576, %v574
    %v623 = vpack.c.b16 %v577, %v575
    %v624 = vpack.c.b16 %v580, %v578
    %v625 = vpack.c.b16 %v581, %v579
    %v626 = vpack.c.b16 %v584, %v582
    %v627 = vpack.c.b16 %v585, %v583
    %v628 = vpack.c.b16 %v588, %v586
    %v629 = vpack.c.b16 %v589, %v587
    %v630 = vpack.c.b16 %v592, %v590
    %v631 = vpack.c.b16 %v593, %v591
    %v632 = vpack.c.b16 %v596, %v594
    %v633 = vpack.c.b16 %v597, %v595
    %v634 = vpack.c.b16 %v600, %v598
    %v635 = vpack.c.b16 %v601, %v599
    %v636 = vpack.c.b16 %v604, %v602
    %v637 = vpack.c.b16 %v605, %v603
    %670 = vmatprep.subr.bf16.mxu0 %v607
    %671 = vmatpush1.bf16.msra.mxu0 %v606
    %672 = vmatprep.subr.bf16.mxu0 %v609
    %673 = vmatpush1.bf16.msra.mxu0 %v608
    %674 = vmatprep.subr.bf16.mxu0 %v611
    %675 = vmatpush1.bf16.msra.mxu0 %v610
    %676 = vmatprep.subr.bf16.mxu0 %v613
    %677 = vmatpush1.bf16.msra.mxu0 %v612
    %678 = vmatprep.subr.bf16.mxu0 %v615
    %679 = vmatpush1.bf16.msra.mxu0 %v614
    %680 = vmatprep.subr.bf16.mxu0 %v617
    %681 = vmatpush1.bf16.msra.mxu0 %v616
    %682 = vmatprep.subr.bf16.mxu0 %v619
    %683 = vmatpush1.bf16.msra.mxu0 %v618
    %684 = vmatprep.subr.bf16.mxu0 %v621
    %685 = vmatpush1.bf16.msra.mxu0 %v620
    %686 = vmatprep.subr.bf16.mxu0 %v623
    %687 = vmatpush1.bf16.msra.mxu0 %v622
    %688 = vmatprep.subr.bf16.mxu0 %v625
    %689 = vmatpush1.bf16.msra.mxu0 %v624
    %690 = vmatprep.subr.bf16.mxu0 %v627
    %691 = vmatpush1.bf16.msra.mxu0 %v626
    %692 = vmatprep.subr.bf16.mxu0 %v629
    %693 = vmatpush1.bf16.msra.mxu0 %v628
    %694 = vmatprep.subr.bf16.mxu0 %v631
    %695 = vmatpush1.bf16.msra.mxu0 %v630
    %696 = vmatprep.subr.bf16.mxu0 %v633
    %697 = vmatpush1.bf16.msra.mxu0 %v632
    %698 = vmatprep.subr.bf16.mxu0 %v635
    %699 = vmatpush1.bf16.msra.mxu0 %v634
    %700 = vmatprep.subr.bf16.mxu0 %v637
    %701 = vmatpush1.bf16.msra.mxu0 %v636
    %702 = vmatprep.mubr.bf16.mxu0 %v509
    %703 = vmatmul.mubr.bf16.gmra.mrb[0].mxu0 %v508
    %v704 = vpop.f32.mrb[0].mxu0
    %v705 = vadd.f32 0.0, %v704
    %v706 = vpop.f32.mrb[0].mxu0
    %v707 = vadd.f32 0.0, %v706
    %v708 = vpop.f32.mrb[0].mxu0
    %v709 = vpop.f32.mrb[0].mxu0
    %710 = vdwg.mxu0
    %v711 = vadd.f32 %v138, %v705
    %v712 = vadd.f32 %v139, %v707
    %v713 = vtanh.pop %v711
    %v714 = vtanh.pop %v712
    %v715 = vpack.c.bf16 %v713, %v713
    %v716 = vpack.c.bf16 %v714, %v714
    %717 = vmatprep.subr.bf16.mxu0 %v607
    %718 = vmatpush1.bf16.msra.mxu0 %v606
    %719 = vmatprep.subr.bf16.mxu0 %v609
    %720 = vmatpush1.bf16.msra.mxu0 %v608
    %721 = vmatprep.subr.bf16.mxu0 %v611
    %722 = vmatpush1.bf16.msra.mxu0 %v610
    %723 = vmatprep.subr.bf16.mxu0 %v613
    %724 = vmatpush1.bf16.msra.mxu0 %v612
    %725 = vmatprep.subr.bf16.mxu0 %v615
    %726 = vmatpush1.bf16.msra.mxu0 %v614
    %727 = vmatprep.subr.bf16.mxu0 %v617
    %728 = vmatpush1.bf16.msra.mxu0 %v616
    %729 = vmatprep.subr.bf16.mxu0 %v619
    %730 = vmatpush1.bf16.msra.mxu0 %v618
    %731 = vmatprep.subr.bf16.mxu0 %v621
    %732 = vmatpush1.bf16.msra.mxu0 %v620
    %733 = vmatprep.subr.bf16.mxu0 %v623
    %734 = vmatpush1.bf16.msra.mxu0 %v622
    %735 = vmatprep.subr.bf16.mxu0 %v625
    %736 = vmatpush1.bf16.msra.mxu0 %v624
    %737 = vmatprep.subr.bf16.mxu0 %v627
    %738 = vmatpush1.bf16.msra.mxu0 %v626
    %739 = vmatprep.subr.bf16.mxu0 %v629
    %740 = vmatpush1.bf16.msra.mxu0 %v628
    %741 = vmatprep.subr.bf16.mxu0 %v631
    %742 = vmatpush1.bf16.msra.mxu0 %v630
    %743 = vmatprep.subr.bf16.mxu0 %v633
    %744 = vmatpush1.bf16.msra.mxu0 %v632
    %745 = vmatprep.subr.bf16.mxu0 %v635
    %746 = vmatpush1.bf16.msra.mxu0 %v634
    %747 = vmatprep.subr.bf16.mxu0 %v637
    %748 = vmatpush1.bf16.msra.mxu0 %v636
    %749 = vmatprep.mubr.bf16.mxu0 %v716
    %750 = vmatmul.mubr.bf16.gmra.mrb[0].mxu0 %v715
    %v751 = vpop.f32.mrb[0].mxu0
    %v752 = vadd.f32 0.0, %v751
    %v753 = vpop.f32.mrb[0].mxu0
    %v754 = vadd.f32 0.0, %v753
    %v755 = vpop.f32.mrb[0].mxu0
    %v756 = vpop.f32.mrb[0].mxu0
    %757 = vdwg.mxu0
    %v758 = vadd.f32 %v184, %v752
    %v759 = vadd.f32 %v185, %v754
    %v760 = vtanh.pop %v758
    %v761 = vtanh.pop %v759
    %v762 = vpack.c.bf16 %v760, %v760
    %v763 = vpack.c.bf16 %v761, %v761
    %764 = vmatprep.subr.bf16.mxu0 %v607
    %765 = vmatpush1.bf16.msra.mxu0 %v606
    %766 = vmatprep.subr.bf16.mxu0 %v609
    %767 = vmatpush1.bf16.msra.mxu0 %v608
    %768 = vmatprep.subr.bf16.mxu0 %v611
    %769 = vmatpush1.bf16.msra.mxu0 %v610
    %770 = vmatprep.subr.bf16.mxu0 %v613
    %771 = vmatpush1.bf16.msra.mxu0 %v612
    %772 = vmatprep.subr.bf16.mxu0 %v615
    %773 = vmatpush1.bf16.msra.mxu0 %v614
    %774 = vmatprep.subr.bf16.mxu0 %v617
    %775 = vmatpush1.bf16.msra.mxu0 %v616
    %776 = vmatprep.subr.bf16.mxu0 %v619
    %777 = vmatpush1.bf16.msra.mxu0 %v618
    %778 = vmatprep.subr.bf16.mxu0 %v621
    %779 = vmatpush1.bf16.msra.mxu0 %v620
    %780 = vmatprep.subr.bf16.mxu0 %v623
    %781 = vmatpush1.bf16.msra.mxu0 %v622
    %782 = vmatprep.subr.bf16.mxu0 %v625
    %783 = vmatpush1.bf16.msra.mxu0 %v624
    %784 = vmatprep.subr.bf16.mxu0 %v627
    %785 = vmatpush1.bf16.msra.mxu0 %v626
    %786 = vmatprep.subr.bf16.mxu0 %v629
    %787 = vmatpush1.bf16.msra.mxu0 %v628
    %788 = vmatprep.subr.bf16.mxu0 %v631
    %789 = vmatpush1.bf16.msra.mxu0 %v630
    %790 = vmatprep.subr.bf16.mxu0 %v633
    %791 = vmatpush1.bf16.msra.mxu0 %v632
    %792 = vmatprep.subr.bf16.mxu0 %v635
    %793 = vmatpush1.bf16.msra.mxu0 %v634
    %794 = vmatprep.subr.bf16.mxu0 %v637
    %795 = vmatpush1.bf16.msra.mxu0 %v636
    %796 = vmatprep.mubr.bf16.mxu0 %v763
    %797 = vmatmul.mubr.bf16.gmra.mrb[0].mxu0 %v762
    %v798 = vpop.f32.mrb[0].mxu0
    %v799 = vadd.f32 0.0, %v798
    %v800 = vpop.f32.mrb[0].mxu0
    %v801 = vadd.f32 0.0, %v800
    %v802 = vpop.f32.mrb[0].mxu0
    %v803 = vpop.f32.mrb[0].mxu0
    %804 = vdwg.mxu0
    %v805 = vadd.f32 %v230, %v799
    %v806 = vadd.f32 %v231, %v801
    %v807 = vtanh.pop %v805
    %v808 = vtanh.pop %v806
    %v809 = vpack.c.bf16 %v807, %v807
    %v810 = vpack.c.bf16 %v808, %v808
    %811 = vmatprep.subr.bf16.mxu0 %v607
    %812 = vmatpush1.bf16.msra.mxu0 %v606
    %813 = vmatprep.subr.bf16.mxu0 %v609
    %814 = vmatpush1.bf16.msra.mxu0 %v608
    %815 = vmatprep.subr.bf16.mxu0 %v611
    %816 = vmatpush1.bf16.msra.mxu0 %v610
    %817 = vmatprep.subr.bf16.mxu0 %v613
    %818 = vmatpush1.bf16.msra.mxu0 %v612
    %819 = vmatprep.subr.bf16.mxu0 %v615
    %820 = vmatpush1.bf16.msra.mxu0 %v614
    %821 = vmatprep.subr.bf16.mxu0 %v617
    %822 = vmatpush1.bf16.msra.mxu0 %v616
    %823 = vmatprep.subr.bf16.mxu0 %v619
    %824 = vmatpush1.bf16.msra.mxu0 %v618
    %825 = vmatprep.subr.bf16.mxu0 %v621
    %826 = vmatpush1.bf16.msra.mxu0 %v620
    %827 = vmatprep.subr.bf16.mxu0 %v623
    %828 = vmatpush1.bf16.msra.mxu0 %v622
    %829 = vmatprep.subr.bf16.mxu0 %v625
    %830 = vmatpush1.bf16.msra.mxu0 %v624
    %831 = vmatprep.subr.bf16.mxu0 %v627
    %832 = vmatpush1.bf16.msra.mxu0 %v626
    %833 = vmatprep.subr.bf16.mxu0 %v629
    %834 = vmatpush1.bf16.msra.mxu0 %v628
    %835 = vmatprep.subr.bf16.mxu0 %v631
    %836 = vmatpush1.bf16.msra.mxu0 %v630
    %837 = vmatprep.subr.bf16.mxu0 %v633
    %838 = vmatpush1.bf16.msra.mxu0 %v632
    %839 = vmatprep.subr.bf16.mxu0 %v635
    %840 = vmatpush1.bf16.msra.mxu0 %v634
    %841 = vmatprep.subr.bf16.mxu0 %v637
    %842 = vmatpush1.bf16.msra.mxu0 %v636
    %843 = vmatprep.mubr.bf16.mxu0 %v810
    %844 = vmatmul.mubr.bf16.gmra.mrb[0].mxu0 %v809
    %v845 = vpop.f32.mrb[0].mxu0
    %v846 = vadd.f32 0.0, %v845
    %v847 = vpop.f32.mrb[0].mxu0
    %v848 = vadd.f32 0.0, %v847
    %v849 = vpop.f32.mrb[0].mxu0
    %v850 = vpop.f32.mrb[0].mxu0
    %851 = vdwg.mxu0
    %v852 = vadd.f32 %v276, %v846
    %v853 = vadd.f32 %v277, %v848
    %v854 = vtanh.pop %v852
    %v855 = vtanh.pop %v853
    %v856 = vpack.c.bf16 %v854, %v854
    %v857 = vpack.c.bf16 %v855, %v855
    %858 = vmatprep.subr.bf16.mxu0 %v607
    %859 = vmatpush1.bf16.msra.mxu0 %v606
    %860 = vmatprep.subr.bf16.mxu0 %v609
    %861 = vmatpush1.bf16.msra.mxu0 %v608
    %862 = vmatprep.subr.bf16.mxu0 %v611
    %863 = vmatpush1.bf16.msra.mxu0 %v610
    %864 = vmatprep.subr.bf16.mxu0 %v613
    %865 = vmatpush1.bf16.msra.mxu0 %v612
    %866 = vmatprep.subr.bf16.mxu0 %v615
    %867 = vmatpush1.bf16.msra.mxu0 %v614
    %868 = vmatprep.subr.bf16.mxu0 %v617
    %869 = vmatpush1.bf16.msra.mxu0 %v616
    %870 = vmatprep.subr.bf16.mxu0 %v619
    %871 = vmatpush1.bf16.msra.mxu0 %v618
    %872 = vmatprep.subr.bf16.mxu0 %v621
    %873 = vmatpush1.bf16.msra.mxu0 %v620
    %874 = vmatprep.subr.bf16.mxu0 %v623
    %875 = vmatpush1.bf16.msra.mxu0 %v622
    %876 = vmatprep.subr.bf16.mxu0 %v625
    %877 = vmatpush1.bf16.msra.mxu0 %v624
    %878 = vmatprep.subr.bf16.mxu0 %v627
    %879 = vmatpush1.bf16.msra.mxu0 %v626
    %880 = vmatprep.subr.bf16.mxu0 %v629
    %881 = vmatpush1.bf16.msra.mxu0 %v628
    %882 = vmatprep.subr.bf16.mxu0 %v631
    %883 = vmatpush1.bf16.msra.mxu0 %v630
    %884 = vmatprep.subr.bf16.mxu0 %v633
    %885 = vmatpush1.bf16.msra.mxu0 %v632
    %886 = vmatprep.subr.bf16.mxu0 %v635
    %887 = vmatpush1.bf16.msra.mxu0 %v634
    %888 = vmatprep.subr.bf16.mxu0 %v637
    %889 = vmatpush1.bf16.msra.mxu0 %v636
    %890 = vmatprep.mubr.bf16.mxu0 %v857
    %891 = vmatmul.mubr.bf16.gmra.mrb[0].mxu0 %v856
    %v892 = vpop.f32.mrb[0].mxu0
    %v893 = vadd.f32 0.0, %v892
    %v894 = vpop.f32.mrb[0].mxu0
    %v895 = vadd.f32 0.0, %v894
    %v896 = vpop.f32.mrb[0].mxu0
    %v897 = vpop.f32.mrb[0].mxu0
    %898 = vdwg.mxu0
    %v899 = vadd.f32 %v322, %v893
    %v900 = vadd.f32 %v323, %v895
    %v901 = vtanh.pop %v899
    %v902 = vtanh.pop %v900
    %v903 = vpack.c.bf16 %v901, %v901
    %v904 = vpack.c.bf16 %v902, %v902
    %905 = vmatprep.subr.bf16.mxu0 %v607
    %906 = vmatpush1.bf16.msra.mxu0 %v606
    %907 = vmatprep.subr.bf16.mxu0 %v609
    %908 = vmatpush1.bf16.msra.mxu0 %v608
    %909 = vmatprep.subr.bf16.mxu0 %v611
    %910 = vmatpush1.bf16.msra.mxu0 %v610
    %911 = vmatprep.subr.bf16.mxu0 %v613
    %912 = vmatpush1.bf16.msra.mxu0 %v612
    %913 = vmatprep.subr.bf16.mxu0 %v615
    %914 = vmatpush1.bf16.msra.mxu0 %v614
    %915 = vmatprep.subr.bf16.mxu0 %v617
    %916 = vmatpush1.bf16.msra.mxu0 %v616
    %917 = vmatprep.subr.bf16.mxu0 %v619
    %918 = vmatpush1.bf16.msra.mxu0 %v618
    %919 = vmatprep.subr.bf16.mxu0 %v621
    %920 = vmatpush1.bf16.msra.mxu0 %v620
    %921 = vmatprep.subr.bf16.mxu0 %v623
    %922 = vmatpush1.bf16.msra.mxu0 %v622
    %923 = vmatprep.subr.bf16.mxu0 %v625
    %924 = vmatpush1.bf16.msra.mxu0 %v624
    %925 = vmatprep.subr.bf16.mxu0 %v627
    %926 = vmatpush1.bf16.msra.mxu0 %v626
    %927 = vmatprep.subr.bf16.mxu0 %v629
    %928 = vmatpush1.bf16.msra.mxu0 %v628
    %929 = vmatprep.subr.bf16.mxu0 %v631
    %930 = vmatpush1.bf16.msra.mxu0 %v630
    %931 = vmatprep.subr.bf16.mxu0 %v633
    %932 = vmatpush1.bf16.msra.mxu0 %v632
    %933 = vmatprep.subr.bf16.mxu0 %v635
    %934 = vmatpush1.bf16.msra.mxu0 %v634
    %935 = vmatprep.subr.bf16.mxu0 %v637
    %936 = vmatpush1.bf16.msra.mxu0 %v636
    %937 = vmatprep.mubr.bf16.mxu0 %v904
    %938 = vmatmul.mubr.bf16.gmra.mrb[0].mxu0 %v903
    %v939 = vpop.f32.mrb[0].mxu0
    %v940 = vadd.f32 0.0, %v939
    %v941 = vpop.f32.mrb[0].mxu0
    %v942 = vadd.f32 0.0, %v941
    %v943 = vpop.f32.mrb[0].mxu0
    %v944 = vpop.f32.mrb[0].mxu0
    %945 = vdwg.mxu0
    %v946 = vadd.f32 %v368, %v940
    %v947 = vadd.f32 %v369, %v942
    %v948 = vtanh.pop %v946
    %v949 = vtanh.pop %v947
    %v950 = vpack.c.bf16 %v948, %v948
    %v951 = vpack.c.bf16 %v949, %v949
    %952 = vmatprep.subr.bf16.mxu0 %v607
    %953 = vmatpush1.bf16.msra.mxu0 %v606
    %954 = vmatprep.subr.bf16.mxu0 %v609
    %955 = vmatpush1.bf16.msra.mxu0 %v608
    %956 = vmatprep.subr.bf16.mxu0 %v611
    %957 = vmatpush1.bf16.msra.mxu0 %v610
    %958 = vmatprep.subr.bf16.mxu0 %v613
    %959 = vmatpush1.bf16.msra.mxu0 %v612
    %960 = vmatprep.subr.bf16.mxu0 %v615
    %961 = vmatpush1.bf16.msra.mxu0 %v614
    %962 = vmatprep.subr.bf16.mxu0 %v617
    %963 = vmatpush1.bf16.msra.mxu0 %v616
    %964 = vmatprep.subr.bf16.mxu0 %v619
    %965 = vmatpush1.bf16.msra.mxu0 %v618
    %966 = vmatprep.subr.bf16.mxu0 %v621
    %967 = vmatpush1.bf16.msra.mxu0 %v620
    %968 = vmatprep.subr.bf16.mxu0 %v623
    %969 = vmatpush1.bf16.msra.mxu0 %v622
    %970 = vmatprep.subr.bf16.mxu0 %v625
    %971 = vmatpush1.bf16.msra.mxu0 %v624
    %972 = vmatprep.subr.bf16.mxu0 %v627
    %973 = vmatpush1.bf16.msra.mxu0 %v626
    %974 = vmatprep.subr.bf16.mxu0 %v629
    %975 = vmatpush1.bf16.msra.mxu0 %v628
    %976 = vmatprep.subr.bf16.mxu0 %v631
    %977 = vmatpush1.bf16.msra.mxu0 %v630
    %978 = vmatprep.subr.bf16.mxu0 %v633
    %979 = vmatpush1.bf16.msra.mxu0 %v632
    %980 = vmatprep.subr.bf16.mxu0 %v635
    %981 = vmatpush1.bf16.msra.mxu0 %v634
    %982 = vmatprep.subr.bf16.mxu0 %v637
    %983 = vmatpush1.bf16.msra.mxu0 %v636
    %984 = vmatprep.mubr.bf16.mxu0 %v951
    %985 = vmatmul.mubr.bf16.gmra.mrb[0].mxu0 %v950
    %v986 = vpop.f32.mrb[0].mxu0
    %v987 = vadd.f32 0.0, %v986
    %v988 = vpop.f32.mrb[0].mxu0
    %v989 = vadd.f32 0.0, %v988
    %v990 = vpop.f32.mrb[0].mxu0
    %v991 = vpop.f32.mrb[0].mxu0
    %992 = vdwg.mxu0
    %v993 = vadd.f32 %v414, %v987
    %v994 = vadd.f32 %v415, %v989
    %v995 = vtanh.pop %v993
    %v996 = vtanh.pop %v994
    %v997 = vpack.c.bf16 %v995, %v995
    %v998 = vpack.c.bf16 %v996, %v996
    %999 = vmatprep.subr.bf16.mxu0 %v607
    %1000 = vmatpush1.bf16.msra.mxu0 %v606
    %1001 = vmatprep.subr.bf16.mxu0 %v609
    %1002 = vmatpush1.bf16.msra.mxu0 %v608
    %1003 = vmatprep.subr.bf16.mxu0 %v611
    %1004 = vmatpush1.bf16.msra.mxu0 %v610
    %1005 = vmatprep.subr.bf16.mxu0 %v613
    %1006 = vmatpush1.bf16.msra.mxu0 %v612
    %1007 = vmatprep.subr.bf16.mxu0 %v615
    %1008 = vmatpush1.bf16.msra.mxu0 %v614
    %1009 = vmatprep.subr.bf16.mxu0 %v617
    %1010 = vmatpush1.bf16.msra.mxu0 %v616
    %1011 = vmatprep.subr.bf16.mxu0 %v619
    %1012 = vmatpush1.bf16.msra.mxu0 %v618
    %1013 = vmatprep.subr.bf16.mxu0 %v621
    %1014 = vmatpush1.bf16.msra.mxu0 %v620
    %1015 = vmatprep.subr.bf16.mxu0 %v623
    %1016 = vmatpush1.bf16.msra.mxu0 %v622
    %1017 = vmatprep.subr.bf16.mxu0 %v625
    %1018 = vmatpush1.bf16.msra.mxu0 %v624
    %1019 = vmatprep.subr.bf16.mxu0 %v627
    %1020 = vmatpush1.bf16.msra.mxu0 %v626
    %1021 = vmatprep.subr.bf16.mxu0 %v629
    %1022 = vmatpush1.bf16.msra.mxu0 %v628
    %1023 = vmatprep.subr.bf16.mxu0 %v631
    %1024 = vmatpush1.bf16.msra.mxu0 %v630
    %1025 = vmatprep.subr.bf16.mxu0 %v633
    %1026 = vmatpush1.bf16.msra.mxu0 %v632
    %1027 = vmatprep.subr.bf16.mxu0 %v635
    %1028 = vmatpush1.bf16.msra.mxu0 %v634
    %1029 = vmatprep.subr.bf16.mxu0 %v637
    %1030 = vmatpush1.bf16.msra.mxu0 %v636
    %1031 = vmatprep.mubr.bf16.mxu0 %v998
    %1032 = vmatmul.mubr.bf16.gmra.mrb[0].mxu0 %v997
    %v1033 = vpop.f32.mrb[0].mxu0
    %v1034 = vadd.f32 0.0, %v1033
    %v1035 = vpop.f32.mrb[0].mxu0
    %v1036 = vadd.f32 0.0, %v1035
    %v1037 = vpop.f32.mrb[0].mxu0
    %v1038 = vpop.f32.mrb[0].mxu0
    %1039 = vdwg.mxu0
    %v1040 = vadd.f32 %v460, %v1034
    %v1041 = vadd.f32 %v461, %v1036
    %v1042 = vtanh.pop %v1040
    %v1043 = vtanh.pop %v1041
    %v1046 = vcombine.low %v1042, %v1043
    %v1048 = vunpack.c.l.s4 1983009808
    %v1049 = vunpack.c.0.s8 %v1048
    %v1050 = vlaneseq
    %v1051 = vshrl.u32 %v1050, 7
    %v1052 = vsub.s32 %v1049, %v1051
    %v1053 = vrot.slane %v1046, %v1052
    %1055 = vst [vmem:[#allocation13] sm:$0xf] %v1053
    %v1058 = vrot.slane %v760, 7
    %v1059 = vrot.slane %v761, 7
    %v1064 = vrot.slane %v807, 6
    %v1065 = vrot.slane %v808, 6
    %v1070 = vrot.slane %v854, 5
    %v1071 = vrot.slane %v855, 5
    %v1076 = vrot.slane %v901, 4
    %v1077 = vrot.slane %v902, 4
    %v1082 = vrot.slane %v948, 3
    %v1083 = vrot.slane %v949, 3
    %v1088 = vrot.slane %v995, 2
    %v1089 = vrot.slane %v996, 2
    %v1092 = vrot.slane %v1042, 1
    %v1093 = vrot.slane %v1043, 1
    %v1098 = vrot.slane %v713, 1
    %v1099 = vrot.slane %v714, 1
    %v1102 = vrot.slane %v807, 7
    %v1103 = vrot.slane %v808, 7
    %v1106 = vrot.slane %v854, 6
    %v1107 = vrot.slane %v855, 6
    %v1110 = vrot.slane %v901, 5
    %v1111 = vrot.slane %v902, 5
    %v1114 = vrot.slane %v948, 4
    %v1115 = vrot.slane %v949, 4
    %v1118 = vrot.slane %v995, 3
    %v1119 = vrot.slane %v996, 3
    %v1122 = vrot.slane %v1042, 2
    %v1123 = vrot.slane %v1043, 2
    %v1126 = vsel %vm134, %v713, %v1058
    %v1127 = vsel %vm134, %v714, %v1059
    %v1128 = vsel %vm137, %v1126, %v1064
    %v1129 = vsel %vm137, %v1127, %v1065
    %vm1130 = vcmask 1042432
    %v1131 = vsel %vm1130, %v1128, %v1070
    %v1132 = vsel %vm1130, %v1129, %v1071
    %vm1133 = vcmask 1043456
    %v1134 = vsel %vm1133, %v1131, %v1076
    %v1135 = vsel %vm1133, %v1132, %v1077
    %vm1136 = vcmask 1044480
    %v1137 = vsel %vm1136, %v1134, %v1082
    %v1138 = vsel %vm1136, %v1135, %v1083
    %vm1139 = vcmask 1045504
    %v1140 = vsel %vm1139, %v1137, %v1088
    %v1141 = vsel %vm1139, %v1138, %v1089
    %vm1142 = vcmask 1046528
    %v1143 = vsel %vm1142, %v1140, %v1092
    %v1144 = vsel %vm1142, %v1141, %v1093
    %v1145 = vsel %vm134, %v1098, %v760
    %v1146 = vsel %vm134, %v1099, %v761
    %v1147 = vsel %vm137, %v1145, %v1102
    %v1148 = vsel %vm137, %v1146, %v1103
    %v1149 = vsel %vm1130, %v1147, %v1106
    %v1150 = vsel %vm1130, %v1148, %v1107
    %v1151 = vsel %vm1133, %v1149, %v1110
    %v1152 = vsel %vm1133, %v1150, %v1111
    %v1153 = vsel %vm1136, %v1151, %v1114
    %v1154 = vsel %vm1136, %v1152, %v1115
    %v1155 = vsel %vm1139, %v1153, %v1118
    %v1156 = vsel %vm1139, %v1154, %v1119
    %v1157 = vsel %vm1142, %v1155, %v1122
    %v1158 = vsel %vm1142, %v1156, %v1123
    %v1159 = vpack.c.bf16 %v1157, %v1143
    %v1160 = vpack.c.bf16 %v1158, %v1144
    %v1161 = vld [vmem:[#allocation10] sm:$0xf]
    %v1162 = vld [vmem:[#allocation10 + $0x4] sm:$0xf]
    %v1163 = vld [vmem:[#allocation10 + $0x8] sm:$0xf]
    %v1164 = vld [vmem:[#allocation10 + $0xc] sm:$0xf]
    %v1165 = vld [vmem:[#allocation10 + $0x10] sm:$0xf]
    %v1166 = vld [vmem:[#allocation10 + $0x14] sm:$0xf]
    %v1167 = vld [vmem:[#allocation10 + $0x18] sm:$0xf]
    %v1168 = vld [vmem:[#allocation10 + $0x1c] sm:$0xf]
    %v1169 = vld [vmem:[#allocation10 + $0x20] sm:$0xf]
    %v1170 = vld [vmem:[#allocation10 + $0x24] sm:$0xf]
    %v1171 = vld [vmem:[#allocation10 + $0x28] sm:$0xf]
    %v1172 = vld [vmem:[#allocation10 + $0x2c] sm:$0xf]
    %v1173 = vld [vmem:[#allocation10 + $0x30] sm:$0xf]
    %v1174 = vld [vmem:[#allocation10 + $0x34] sm:$0xf]
    %v1175 = vld [vmem:[#allocation10 + $0x38] sm:$0xf]
    %v1176 = vld [vmem:[#allocation10 + $0x3c] sm:$0xf]
    %v1177 = vld [vmem:[#allocation10 + $0x40] sm:$0xf]
    %v1178 = vld [vmem:[#allocation10 + $0x44] sm:$0xf]
    %v1179 = vld [vmem:[#allocation10 + $0x48] sm:$0xf]
    %v1180 = vld [vmem:[#allocation10 + $0x4c] sm:$0xf]
    %v1181 = vld [vmem:[#allocation10 + $0x50] sm:$0xf]
    %v1182 = vld [vmem:[#allocation10 + $0x54] sm:$0xf]
    %v1183 = vld [vmem:[#allocation10 + $0x58] sm:$0xf]
    %v1184 = vld [vmem:[#allocation10 + $0x5c] sm:$0xf]
    %v1185 = vld [vmem:[#allocation10 + $0x60] sm:$0xf]
    %v1186 = vld [vmem:[#allocation10 + $0x64] sm:$0xf]
    %v1187 = vld [vmem:[#allocation10 + $0x68] sm:$0xf]
    %v1188 = vld [vmem:[#allocation10 + $0x6c] sm:$0xf]
    %v1189 = vld [vmem:[#allocation10 + $0x70] sm:$0xf]
    %v1190 = vld [vmem:[#allocation10 + $0x74] sm:$0xf]
    %v1191 = vld [vmem:[#allocation10 + $0x78] sm:$0xf]
    %v1192 = vld [vmem:[#allocation10 + $0x7c] sm:$0xf]
    %v1193 = vld [vmem:[%s5] sm:$0x1]
    %v1195 = vlaneseq
    %v1196 = vshrl.u32 %v1195, 7
    %v1197 = vsub.s32 0, %v1196
    %v1198 = vrot.slane %v1193, %v1197
    %v1232 = vunpack.c.l.b16 %v1161
    %v1233 = vunpack.c.l.b16 %v1162
    %v1234 = vunpack.c.l.b16 %v1163
    %v1235 = vunpack.c.l.b16 %v1164
    %v1236 = vunpack.c.l.b16 %v1165
    %v1237 = vunpack.c.l.b16 %v1166
    %v1238 = vunpack.c.l.b16 %v1167
    %v1239 = vunpack.c.l.b16 %v1168
    %v1240 = vunpack.c.l.b16 %v1169
    %v1241 = vunpack.c.l.b16 %v1170
    %v1242 = vunpack.c.l.b16 %v1171
    %v1243 = vunpack.c.l.b16 %v1172
    %v1244 = vunpack.c.l.b16 %v1173
    %v1245 = vunpack.c.l.b16 %v1174
    %v1246 = vunpack.c.l.b16 %v1175
    %v1247 = vunpack.c.l.b16 %v1176
    %v1248 = vunpack.c.l.b16 %v1177
    %v1249 = vunpack.c.l.b16 %v1178
    %v1250 = vunpack.c.l.b16 %v1179
    %v1251 = vunpack.c.l.b16 %v1180
    %v1252 = vunpack.c.l.b16 %v1181
    %v1253 = vunpack.c.l.b16 %v1182
    %v1254 = vunpack.c.l.b16 %v1183
    %v1255 = vunpack.c.l.b16 %v1184
    %v1256 = vunpack.c.l.b16 %v1185
    %v1257 = vunpack.c.l.b16 %v1186
    %v1258 = vunpack.c.l.b16 %v1187
    %v1259 = vunpack.c.l.b16 %v1188
    %v1260 = vunpack.c.l.b16 %v1189
    %v1261 = vunpack.c.l.b16 %v1190
    %v1262 = vunpack.c.l.b16 %v1191
    %v1263 = vunpack.c.l.b16 %v1192
    %v1264 = vpack.c.b16 %v1233, %v1232
    %v1265 = vpack.c.b16 %v1235, %v1234
    %v1266 = vpack.c.b16 %v1237, %v1236
    %v1267 = vpack.c.b16 %v1239, %v1238
    %v1268 = vpack.c.b16 %v1241, %v1240
    %v1269 = vpack.c.b16 %v1243, %v1242
    %v1270 = vpack.c.b16 %v1245, %v1244
    %v1271 = vpack.c.b16 %v1247, %v1246
    %v1272 = vpack.c.b16 %v1249, %v1248
    %v1273 = vpack.c.b16 %v1251, %v1250
    %v1274 = vpack.c.b16 %v1253, %v1252
    %v1275 = vpack.c.b16 %v1255, %v1254
    %v1276 = vpack.c.b16 %v1257, %v1256
    %v1277 = vpack.c.b16 %v1259, %v1258
    %v1278 = vpack.c.b16 %v1261, %v1260
    %v1279 = vpack.c.b16 %v1263, %v1262
    %1296 = vmatprep.subr.bf16.mxu0 0
    %1297 = vmatpush1.bf16.msra.mxu0 %v1264
    %1298 = vmatprep.subr.bf16.mxu0 0
    %1299 = vmatpush1.bf16.msra.mxu0 %v1265
    %1300 = vmatprep.subr.bf16.mxu0 0
    %1301 = vmatpush1.bf16.msra.mxu0 %v1266
    %1302 = vmatprep.subr.bf16.mxu0 0
    %1303 = vmatpush1.bf16.msra.mxu0 %v1267
    %1304 = vmatprep.subr.bf16.mxu0 0
    %1305 = vmatpush1.bf16.msra.mxu0 %v1268
    %1306 = vmatprep.subr.bf16.mxu0 0
    %1307 = vmatpush1.bf16.msra.mxu0 %v1269
    %1308 = vmatprep.subr.bf16.mxu0 0
    %1309 = vmatpush1.bf16.msra.mxu0 %v1270
    %1310 = vmatprep.subr.bf16.mxu0 0
    %1311 = vmatpush1.bf16.msra.mxu0 %v1271
    %1312 = vmatprep.subr.bf16.mxu0 0
    %1313 = vmatpush1.bf16.msra.mxu0 %v1272
    %1314 = vmatprep.subr.bf16.mxu0 0
    %1315 = vmatpush1.bf16.msra.mxu0 %v1273
    %1316 = vmatprep.subr.bf16.mxu0 0
    %1317 = vmatpush1.bf16.msra.mxu0 %v1274
    %1318 = vmatprep.subr.bf16.mxu0 0
    %1319 = vmatpush1.bf16.msra.mxu0 %v1275
    %1320 = vmatprep.subr.bf16.mxu0 0
    %1321 = vmatpush1.bf16.msra.mxu0 %v1276
    %1322 = vmatprep.subr.bf16.mxu0 0
    %1323 = vmatpush1.bf16.msra.mxu0 %v1277
    %1324 = vmatprep.subr.bf16.mxu0 0
    %1325 = vmatpush1.bf16.msra.mxu0 %v1278
    %1326 = vmatprep.subr.bf16.mxu0 0
    %1327 = vmatpush1.bf16.msra.mxu0 %v1279
    %1328 = vmatprep.mubr.bf16.mxu0 %v1160
    %1329 = vmatmul.mubr.bf16.gmra.mrb[0].mxu0 %v1159
    %v1330 = vpop.f32.mrb[0].mxu0
    %v1331 = vadd.f32 %v1198, %v1330
    %v1332 = vpop.f32.mrb[0].mxu0
    %v1333 = vpop.f32.mrb[0].mxu0
    %v1334 = vadd.f32 %v1198, %v1333
    %v1335 = vpop.f32.mrb[0].mxu0
    %1336 = vdwg.mxu0
    %1337 = vst [vmem:[#allocation12] sm:$0xff] %v1331
    %1338 = vst [vmem:[#allocation12 + $0x8] sm:$0xff] %v1334
    // Predicated region
    $region46: #{text_generator_forward.1} parent=1 // pred_check
      _
    $region47: #{text_generator_forward.1} parent=1 // pred_check_branch
      %1340 = sbr.rel (0) target = $region49
    $region48: #{text_generator_forward.1} parent=1 // pred_region
      %s1342 = ssub.s32 256, 256
      %1343 = vsyncadd [#allocation4], %s1342
      %s1344 = sshll.u32 [#allocation12], 4
      %s1345 = int_to_ptr.vmem [resolvable:$true] %s1344
      %1350 = dma.vmem_to_hbm [thread:$0]  %s1345, 256, %s6, [#allocation4], 128, 128, 8
    $region49: #{text_generator_forward.1} parent=1 // pred_fallthru
      _
    // Predicated region
    $region50: #{text_generator_forward.1} parent=1 // pred_check
      _
    $region51: #{text_generator_forward.1} parent=1 // pred_check_branch
      %1352 = sbr.rel (0) target = $region53
    $region52: #{text_generator_forward.1} parent=1 // pred_region
      %s1354 = ssub.s32 64, 64
      %1355 = vsyncadd [#allocation14], %s1354
      %s1357 = sshll.u32 [#allocation13], 4
      %s1358 = int_to_ptr.vmem [resolvable:$true] %s1357
      %1360 = dma.vmem_to_hbm [thread:$0]  %s1358, 64, %s7, [#allocation14]
    $region53: #{text_generator_forward.1} parent=1 // pred_fallthru
      _
    // Predicated region
    $region54: #{text_generator_forward.1} parent=1 // pred_check
      _
    $region55: #{text_generator_forward.1} parent=1 // pred_check_branch
      %1362 = sbr.rel (0) target = $region57
    $region56: #{text_generator_forward.1} parent=1 // pred_region
      %1363 = dma.done [#allocation4], 256
    $region57: #{text_generator_forward.1} parent=1 // pred_fallthru
      _
    // Predicated region
    $region58: #{text_generator_forward.1} parent=1 // pred_check
      _
    $region59: #{text_generator_forward.1} parent=1 // pred_check_branch
      %1365 = sbr.rel (0) target = $region61
    $region60: #{text_generator_forward.1} parent=1 // pred_region
      %1366 = dma.done [#allocation14], 64
    $region61: #{text_generator_forward.1} parent=1 // pred_fallthru
      _
    %1367 = vsyncpa [#allocation3], 1
    %1368 = vsyncpa [#allocation8], 1
    %1369 = vsyncpa [#allocation11], 1
    %1370 = vsyncpa [#allocation4], 1
    %1371 = vsyncpa [#allocation14], 1
    %1372 = vsyncpa [#allocation5], 1

</llo_original>
